<compile_context>
chip_gen: v7x
topology: tpu7x:2x2x1
jax: 0.10.0
libtpu: 0.0.40
codegen_flags: <defaults>
</compile_context>

<pallas_src>
import functools

import jax
import jax.numpy as jnp
import numpy as np
from jax.experimental import pallas as pl
from jax.experimental.pallas import tpu as pltpu


def _round_up(x, m):
    return ((x + m - 1) // m) * m


# ---------------------------------------------------------------------------
# Kernel 1: fused node-level projections   emb_rel @ [Wa_h | Wa_t | Wg] + b
# (M-tiled grid; weights resident across the grid.)
# ---------------------------------------------------------------------------
def node_projection_kernel(x_ref, w_ref, b_ref, o_ref):
    # Kept in f32: O(N*Din*Dout) is negligible vs. the O(N*E*Dout) attention
    # kernel, and it preserves precision of both the logits and the values.
    o_ref[...] = (jnp.dot(x_ref[...], w_ref[...],
                          preferred_element_type=jnp.float32) + b_ref[...])


# ---------------------------------------------------------------------------
# Kernel 2: edge-tiled attention + aggregation with per-head online softmax.
#
# Grid: (num_node_tiles ["parallel"], num_edge_tiles ["arbitrary"]).
# out_ref block (node_tile, Dout) is the un-normalised accumulator for the
# current node window; run_ref [1, H] is the per-head running shift reference,
# run_sum [node_tile, H] the per-node exp sums.  Normalisation happens once,
# on the last edge tile.
# ---------------------------------------------------------------------------
def ingram_attention_kernel(ph_ref, pt_ref, v_ref, bin_ref, head_ref,
                            p_dh_ref, p_hd_ref,
                            out_ref, run_ref, run_sum,
                            *, node_tile, negative_slope):
    f32 = jnp.float32
    bf16 = jnp.bfloat16
    e_step = pl.program_id(1)
    edge_tile = ph_ref.shape[0]
    neg_big = jnp.float32(-1e30)   # finite sentinel; padded edges carry it as bias

    @pl.when(e_step == 0)
    def _init():
        run_ref[...] = jnp.full_like(run_ref, neg_big)
        run_sum[...] = jnp.zeros_like(run_sum)
        out_ref[...] = jnp.zeros_like(out_ref)

    # ---- per-edge attention logits; attn_vec is pre-folded into p_dh_scaled.
    pre = ph_ref[...] + pt_ref[...]                               # [TE, Dout]
    act = jnp.where(pre > 0, pre, negative_slope * pre)           # LeakyReLU(0.2)
    score = jnp.dot(act, p_dh_ref[...],
                    preferred_element_type=f32) + bin_ref[...]    # [TE, H] f32

    # ---- per-HEAD tile max merged into the shared running reference [1, H]
    m_tile = jnp.max(score, axis=0, keepdims=True)                # [1, H]
    new_ref = jnp.maximum(run_ref[...], m_tile)
    alpha = jnp.exp(run_ref[...] - new_ref)                       # [1, H]
    run_ref[...] = new_ref

    expv = jnp.exp(score - new_ref)                               # [TE, H] f32
    expv_b = expv.astype(bf16)

    # ---- incidence of this edge tile against the current node window
    n_off = pl.program_id(0) * node_tile
    n_iota = jax.lax.broadcasted_iota(jnp.int32, (node_tile, edge_tile), 0)
    mask_b = (n_iota == (head_ref[...] - n_off)).astype(bf16)     # [NT, TE] one-hot

    # ---- heavy K=TE scatter matmuls in bf16 (exact one-hot lhs), f32 accum
    tile_sum = jnp.dot(mask_b, expv_b, preferred_element_type=f32)   # [NT, H]
    run_sum[...] = run_sum[...] * alpha + tile_sum

    w_full = jnp.dot(expv, p_hd_ref[...],
                     preferred_element_type=f32)                  # [TE, Dout] (K=H, f32)
    wv = (w_full * v_ref[...]).astype(bf16)                       # [TE, Dout]
    contrib = jnp.dot(mask_b, wv, preferred_element_type=f32)     # [NT, Dout]

    alpha_full = jnp.dot(alpha, p_hd_ref[...],
                         preferred_element_type=f32)              # [1, Dout] (tiny)
    out_ref[...] = out_ref[...] * alpha_full + contrib

    # ---- node-level normalisation on the last edge tile (EUP reciprocal)
    @pl.when(e_step == pl.num_programs(1) - 1)
    def _finalize():
        denom = jnp.dot(run_sum[...], p_hd_ref[...],
                        preferred_element_type=f32) + 1e-16       # [NT, Dout]
        recip = pl.reciprocal(denom, approx=True)
        recip = recip * (2.0 - denom * recip)   # one Newton step -> ~f32 accurate
        out_ref[...] = out_ref[...] * recip


# ---------------------------------------------------------------------------
# Wrapper
# ---------------------------------------------------------------------------
def ingram_relation_forward(emb_rel, head_idxs, tail_idxs, bins, params,
                            *, num_bin, num_head, edge_tile=256, node_tile=None):
    num_nodes, dim_in = emb_rel.shape
    dim_out = params["wg"].shape[1]
    dim_hid = dim_out // num_head
    num_edges = head_idxs.shape[0]

    emb = emb_rel.astype(jnp.float32)
    wa = params["wa"]
    w_all = jnp.concatenate([wa[:dim_in], wa[dim_in:], params["wg"]], axis=1)
    b_all = jnp.concatenate([jnp.zeros((dim_out,), jnp.float32),
                             params["ba"], params["bg"]]).reshape(1, 3 * dim_out)

    # ---- fused node-level projections (M-tiled Pallas matmul)
    proj_tile = min(256, _round_up(num_nodes, 8))
    n_proj_pad = _round_up(num_nodes, proj_tile)
    emb_p = jnp.pad(emb, ((0, n_proj_pad - num_nodes), (0, 0)))
    proj = pl.pallas_call(
        node_projection_kernel,
        out_shape=jax.ShapeDtypeStruct((n_proj_pad, 3 * dim_out), jnp.float32),
        grid=(n_proj_pad // proj_tile,),
        in_specs=[pl.BlockSpec((proj_tile, dim_in), lambda i: (i, 0)),
                  pl.BlockSpec((dim_in, 3 * dim_out), lambda i: (0, 0)),
                  pl.BlockSpec((1, 3 * dim_out), lambda i: (0, 0))],
        out_specs=pl.BlockSpec((proj_tile, 3 * dim_out), lambda i: (i, 0)),
        compiler_params=pltpu.CompilerParams(dimension_semantics=("parallel",)),
    )(emb_p, w_all, b_all)
    proj_h, proj_t, v_nodes = jnp.split(proj[:num_nodes], 3, axis=1)   # each [N, Dout]

    # ---- per-edge gathers + bin bias gather stay in plain JAX (XLA gathers)
    # TODO(synk): for E >> N, gather ph/pt/v in-kernel from a resident
    # [N, 3*Dout] table via PrefetchScalarGridSpec instead of materialising
    # edge-expanded copies in HBM.
    head_i = head_idxs.astype(jnp.int32)
    tail_i = tail_idxs.astype(jnp.int32)
    bins_i = bins.astype(jnp.int32)

    edge_tile = _round_up(edge_tile, 128)
    e_pad = _round_up(max(num_edges, edge_tile), edge_tile)
    pad_e = e_pad - num_edges

    ph_e = jnp.pad(proj_h[head_i], ((0, pad_e), (0, 0)))                 # [Ep, Dout]
    pt_e = jnp.pad(proj_t[tail_i], ((0, pad_e), (0, 0)))                 # [Ep, Dout]
    v_e = jnp.pad(v_nodes[tail_i], ((0, pad_e), (0, 0)))                 # [Ep, Dout]
    # padded edges carry a -1e30 bias -> never inflate the per-head tile max
    bin_e = jnp.pad(params["attn_bin"][bins_i].reshape(num_edges, num_head),
                    ((0, pad_e), (0, 0)), constant_values=-1e30)         # [Ep, H]

    if node_tile is None:
        node_tile = min(256, _round_up(num_nodes, 8))
    node_tile = _round_up(node_tile, 8)
    n_pad = _round_up(num_nodes, node_tile)
    # padded edges point at node n_pad -> outside every node window
    head_row = jnp.pad(head_i, (0, pad_e),
                       constant_values=n_pad).reshape(1, e_pad)          # [1, Ep]

    # head-membership one-hot projectors (tiny, resident across the grid);
    # attn_vec folded into the [Dout, H] projector used for the logit dot.
    feat = jnp.arange(dim_out, dtype=jnp.int32)
    heads = jnp.arange(num_head, dtype=jnp.int32)
    p_dh = (feat[:, None] // dim_hid == heads[None, :]).astype(jnp.float32)
    attn_vec_flat = params["attn_vec"].reshape(dim_out)
    p_dh_scaled = p_dh * attn_vec_flat[:, None]                          # [Dout, H]
    p_hd = p_dh.T                                                        # [H, Dout]

    # VMEM budget for this tiling (double-buffered inputs + accumulators +
    # mask/exp temporaries), clamped for v7x's 64 MiB physical VMEM.
    vmem_est = 4 * (2 * edge_tile * (3 * dim_out + num_head + 2)
                    + node_tile * (dim_out + num_head)
                    + node_tile * edge_tile
                    + 6 * edge_tile * max(dim_out, num_head)
                    + 3 * dim_out * num_head)
    vmem_limit = int(min(64 * 1024 * 1024, max(16 * 1024 * 1024, 2 * vmem_est)))

    grid = (n_pad // node_tile, e_pad // edge_tile)
    kernel = functools.partial(ingram_attention_kernel,
                               node_tile=node_tile, negative_slope=0.2)

    # TODO(synk): longer term, argsort edges by head node and pass per-tile
    # node-window offsets via scalar prefetch so each edge tile only touches
    # one node window (O(E*window) instead of O(N*E) scatter work).
    # TODO(synk): if dim_out < 128 in production, pad the feature dim to 128
    # inside the kernel (slice in the wrapper) for lane-dense stores.
    out = pl.pallas_call(
        kernel,
        out_shape=jax.ShapeDtypeStruct((n_pad, dim_out), jnp.float32),
        grid=grid,
        in_specs=[
            pl.BlockSpec((edge_tile, dim_out), lambda n, e: (e, 0)),     # ph
            pl.BlockSpec((edge_tile, dim_out), lambda n, e: (e, 0)),     # pt
            pl.BlockSpec((edge_tile, dim_out), lambda n, e: (e, 0)),     # v(tail)
            pl.BlockSpec((edge_tile, num_head), lambda n, e: (e, 0)),    # bin bias
            pl.BlockSpec((1, edge_tile), lambda n, e: (0, e)),           # head idx row
            pl.BlockSpec((dim_out, num_head), lambda n, e: (0, 0)),      # p_dh * vec
            pl.BlockSpec((num_head, dim_out), lambda n, e: (0, 0)),      # p_hd
        ],
        out_specs=pl.BlockSpec((node_tile, dim_out), lambda n, e: (n, 0)),
        scratch_shapes=[pltpu.VMEM((1, num_head), jnp.float32),          # run_ref
                        pltpu.VMEM((node_tile, num_head), jnp.float32)], # run_sum
        compiler_params=pltpu.CompilerParams(
            dimension_semantics=("parallel", "arbitrary"),
            vmem_limit_bytes=vmem_limit),
    )(ph_e, pt_e, v_e, bin_e, head_row, p_dh_scaled, p_hd)
    return out[:num_nodes]


# ---------------------------------------------------------------------------
# Pure-JAX reference mirroring the torch forward exactly (f32 throughout).
# ---------------------------------------------------------------------------
def reference_forward(emb_rel, head_idxs, tail_idxs, bins, params,
                      *, num_bin, num_head):
    num_nodes, dim_in = emb_rel.shape
    dim_out = params["wa"].shape[1]
    dim_hid = dim_out // num_head
    E = head_idxs.shape[0]

    concat = jnp.concatenate([emb_rel[head_idxs], emb_rel[tail_idxs]], axis=-1)
    pa = concat @ params["wa"] + params["ba"]
    act = jnp.where(pa > 0, pa, 0.2 * pa).reshape(E, num_head, dim_hid)
    raw = (act * params["attn_vec"]).sum(-1, keepdims=True) \
        + params["attn_bin"][bins]                                       # [E, H, 1]
    node_max = jax.ops.segment_max(raw, head_idxs, num_segments=num_nodes)
    attn_val = jnp.exp(raw - node_max[head_idxs])
    sums = jax.ops.segment_sum(attn_val, head_idxs, num_segments=num_nodes)
    beta = attn_val / (sums[head_idxs] + 1e-16)
    v = (emb_rel[tail_idxs] @ params["wg"] + params["bg"]).reshape(E, num_head, dim_hid)
    out = jax.ops.segment_sum(beta * v, head_idxs, num_segments=num_nodes)
    return out.reshape(num_nodes, -1)


def init_params(key, dim_in, dim_out, num_bin, num_head):
    """Deterministic synthetic init (xavier-normal-like: scaled gaussians)."""
    dim_hid = dim_out // num_head
    gain = float(np.sqrt(2.0))  # calculate_gain('relu')
    k1, k2, k3, k4 = jax.random.split(key, 4)

    def xavier(k, shape, fan_in, fan_out):
        std = gain * np.sqrt(2.0 / (fan_in + fan_out))
        return std * jax.random.normal(k, shape, dtype=jnp.float32)

    return {
        # stored transposed vs torch (so that y = x @ W + b)
        "wa": xavier(k1, (2 * dim_in, dim_out), 2 * dim_in, dim_out),
        "ba": jnp.zeros((dim_out,), jnp.float32),
        "wg": xavier(k2, (dim_in, dim_out), dim_in, dim_out),
        "bg": jnp.zeros((dim_out,), jnp.float32),
        "attn_bin": xavier(k3, (num_bin, num_head, 1), num_head, 1),
        "attn_vec": xavier(k4, (1, num_head, dim_hid), num_head, dim_hid),
    }


if __name__ == "__main__":
    num_nodes = 64          # number of relations (graph nodes in this layer)
    num_edges = 600         # -> 3 edge tiles of 256 (168 padded edges)
    dim_in_rel = 32
    dim_out_rel = 32
    num_head = 8
    num_bin = 10

    key = jax.random.PRNGKey(0)
    k_emb, k_h, k_t, k_b, k_p = jax.random.split(key, 5)

    emb_rel = jax.random.normal(k_emb, (num_nodes, dim_in_rel), dtype=jnp.float32)
    head_idxs = jax.random.randint(k_h, (num_edges,), 0, num_nodes, dtype=jnp.int32)
    tail_idxs = jax.random.randint(k_t, (num_edges,), 0, num_nodes, dtype=jnp.int32)
    bins = jax.random.randint(k_b, (num_edges,), 0, num_bin, dtype=jnp.int32)

    params = init_params(k_p, dim_in_rel, dim_out_rel, num_bin, num_head)

    # node_tile=32 exercises the parallel node-tile axis (2 node tiles here).
    fwd = jax.jit(functools.partial(ingram_relation_forward,
                                    num_bin=num_bin, num_head=num_head,
                                    edge_tile=256, node_tile=32))
    out = fwd(emb_rel, head_idxs, tail_idxs, bins, params)
    out = jax.block_until_ready(out)

    ref = reference_forward(emb_rel, head_idxs, tail_idxs, bins, params,
                            num_bin=num_bin, num_head=num_head)
    # bf16 MXU operands on the scatter matmuls -> flash-attention-level tolerance
    np.testing.assert_allclose(np.asarray(out), np.asarray(ref),
                               rtol=2e-2, atol=2e-2)
    print("KERNEL_OK")
</pallas_src>

<mosaic_0001>
module attributes {stable_mosaic.version = 11 : i64} {
  func.func @node_projection_kernel(%arg0: i32, %arg1: memref<64x32xf32, #tpu.memory_space<vmem>>, %arg2: memref<32x96xf32, #tpu.memory_space<vmem>>, %arg3: memref<1x96xf32, #tpu.memory_space<vmem>>, %arg4: memref<64x96xf32, #tpu.memory_space<vmem>>) attributes {dimension_semantics = [#tpu.dimension_semantics<parallel>], iteration_bounds = array<i64: 1>, scalar_prefetch = 0 : i64, scratch_operands = 0 : i64, tpu.core_type = #tpu.core_type<tc>, window_params = [{transform_indices = @transform_0, window_bounds = array<i64: 64, 32>}, {pipeline_mode = #tpu.pipeline_mode<synchronous>, transform_indices = @transform_1, window_bounds = array<i64: 32, 96>}, {pipeline_mode = #tpu.pipeline_mode<synchronous>, transform_indices = @transform_2, window_bounds = array<i64: 1, 96>}, {transform_indices = @transform_3, window_bounds = array<i64: 64, 96>}]} {
    %c0 = arith.constant 0 : index
    %c0_0 = arith.constant 0 : index
    %0 = vector.load %arg1[%c0, %c0_0] : memref<64x32xf32, #tpu.memory_space<vmem>>, vector<64x32xf32>
    %c0_1 = arith.constant 0 : index
    %c0_2 = arith.constant 0 : index
    %1 = vector.load %arg2[%c0_1, %c0_2] : memref<32x96xf32, #tpu.memory_space<vmem>>, vector<32x96xf32>
    %cst = arith.constant dense<0.000000e+00> : vector<64x96xf32>
    %2 = tpu.matmul %0, %1, %cst {dimension_numbers = #tpu.dot_dimension_numbers<[1], [0], [0], [1], [0, 0, 1, 1], [], []>} : vector<64x32xf32>, vector<32x96xf32>, vector<64x96xf32> -> vector<64x96xf32>
    %c0_3 = arith.constant 0 : index
    %c0_4 = arith.constant 0 : index
    %3 = vector.load %arg3[%c0_3, %c0_4] : memref<1x96xf32, #tpu.memory_space<vmem>>, vector<1x96xf32>
    %4 = vector.broadcast %3 : vector<1x96xf32> to vector<64x96xf32>
    %5 = arith.addf %2, %4 : vector<64x96xf32>
    %c0_5 = arith.constant 0 : index
    %c0_6 = arith.constant 0 : index
    %6 = vector.load %arg4[%c0_5, %c0_6] : memref<64x96xf32, #tpu.memory_space<vmem>>, vector<64x96xf32>
    tpu.vector_store %arg4[%c0_5, %c0_6], %5 {strides = array<i32>} : memref<64x96xf32, #tpu.memory_space<vmem>>, vector<64x96xf32>,
    return
  }
  func.func @transform_0(%arg0: i32) -> (i32, i32) {
    %c0_i32 = arith.constant 0 : i32
    %c0_i32_0 = arith.constant 0 : i32
    return %arg0, %c0_i32 : i32, i32
  }
  func.func @transform_1(%arg0: i32) -> (i32, i32) {
    %c0_i32 = arith.constant 0 : i32
    %c0_i32_0 = arith.constant 0 : i32
    %c0_i32_1 = arith.constant 0 : i32
    return %c0_i32, %c0_i32_0 : i32, i32
  }
  func.func @transform_2(%arg0: i32) -> (i32, i32) {
    %c0_i32 = arith.constant 0 : i32
    %c0_i32_0 = arith.constant 0 : i32
    %c0_i32_1 = arith.constant 0 : i32
    return %c0_i32, %c0_i32_0 : i32, i32
  }
  func.func @transform_3(%arg0: i32) -> (i32, i32) {
    %c0_i32 = arith.constant 0 : i32
    %c0_i32_0 = arith.constant 0 : i32
    return %arg0, %c0_i32 : i32, i32
  }
}

module attributes {stable_mosaic.version = 11 : i64} {
  func.func @ingram_attention_kernel(%arg0: i32, %arg1: i32, %arg2: memref<256x32xf32, #tpu.memory_space<vmem>>, %arg3: memref<256x32xf32, #tpu.memory_space<vmem>>, %arg4: memref<256x32xf32, #tpu.memory_space<vmem>>, %arg5: memref<256x8xf32, #tpu.memory_space<vmem>>, %arg6: memref<1x256xi32, #tpu.memory_space<vmem>>, %arg7: memref<32x8xf32, #tpu.memory_space<vmem>>, %arg8: memref<8x32xf32, #tpu.memory_space<vmem>>, %arg9: memref<32x32xf32, #tpu.memory_space<vmem>>, %arg10: memref<1x8xf32, #tpu.memory_space<vmem>>, %arg11: memref<32x8xf32, #tpu.memory_space<vmem>>) attributes {dimension_semantics = [#tpu.dimension_semantics<parallel>, #tpu.dimension_semantics<arbitrary>], iteration_bounds = array<i64: 2, 3>, scalar_prefetch = 0 : i64, scratch_operands = 2 : i64, tpu.core_type = #tpu.core_type<tc>, window_params = [{transform_indices = @transform_0, window_bounds = array<i64: 256, 32>}, {transform_indices = @transform_1, window_bounds = array<i64: 256, 32>}, {transform_indices = @transform_2, window_bounds = array<i64: 256, 32>}, {transform_indices = @transform_3, window_bounds = array<i64: 256, 8>}, {transform_indices = @transform_4, window_bounds = array<i64: 1, 256>}, {pipeline_mode = #tpu.pipeline_mode<synchronous>, transform_indices = @transform_5, window_bounds = array<i64: 32, 8>}, {pipeline_mode = #tpu.pipeline_mode<synchronous>, transform_indices = @transform_6, window_bounds = array<i64: 8, 32>}, {transform_indices = @transform_7, window_bounds = array<i64: 32, 32>}]} {
    %c0_i32 = arith.constant 0 : i32
    %0 = arith.cmpi eq, %arg1, %c0_i32 : i32
    %1 = arith.extui %0 : i1 to i32
    %cst = arith.constant -1.000000e+30 : f32
    %c0_i32_0 = arith.constant 0 : i32
    %2 = arith.cmpi ne, %1, %c0_i32_0 : i32
    scf.if %2 {
      %59 = vector.broadcast %cst : f32 to vector<1x8xf32>
      %c0_39 = arith.constant 0 : index
      %c0_40 = arith.constant 0 : index
      %60 = vector.load %arg10[%c0_39, %c0_40] : memref<1x8xf32, #tpu.memory_space<vmem>>, vector<1x8xf32>
      tpu.vector_store %arg10[%c0_39, %c0_40], %59 {strides = array<i32>} : memref<1x8xf32, #tpu.memory_space<vmem>>, vector<1x8xf32>,
      %cst_41 = arith.constant 0.000000e+00 : f32
      %61 = vector.broadcast %cst_41 : f32 to vector<32x8xf32>
      %c0_42 = arith.constant 0 : index
      %c0_43 = arith.constant 0 : index
      %62 = vector.load %arg11[%c0_42, %c0_43] : memref<32x8xf32, #tpu.memory_space<vmem>>, vector<32x8xf32>
      tpu.vector_store %arg11[%c0_42, %c0_43], %61 {strides = array<i32>} : memref<32x8xf32, #tpu.memory_space<vmem>>, vector<32x8xf32>,
      %cst_44 = arith.constant 0.000000e+00 : f32
      %63 = vector.broadcast %cst_44 : f32 to vector<32x32xf32>
      %c0_45 = arith.constant 0 : index
      %c0_46 = arith.constant 0 : index
      %64 = vector.load %arg9[%c0_45, %c0_46] : memref<32x32xf32, #tpu.memory_space<vmem>>, vector<32x32xf32>
      tpu.vector_store %arg9[%c0_45, %c0_46], %63 {strides = array<i32>} : memref<32x32xf32, #tpu.memory_space<vmem>>, vector<32x32xf32>,
    } else {
    }
    %c0 = arith.constant 0 : index
    %c0_1 = arith.constant 0 : index
    %3 = vector.load %arg2[%c0, %c0_1] : memref<256x32xf32, #tpu.memory_space<vmem>>, vector<256x32xf32>
    %c0_2 = arith.constant 0 : index
    %c0_3 = arith.constant 0 : index
    %4 = vector.load %arg3[%c0_2, %c0_3] : memref<256x32xf32, #tpu.memory_space<vmem>>, vector<256x32xf32>
    %5 = arith.addf %3, %4 : vector<256x32xf32>
    %cst_4 = arith.constant 0.000000e+00 : f32
    %6 = vector.broadcast %cst_4 : f32 to vector<256x32xf32>
    %7 = arith.cmpf ogt, %5, %6 : vector<256x32xf32>
    %cst_5 = arith.constant 2.000000e-01 : f32
    %8 = vector.broadcast %cst_5 : f32 to vector<256x32xf32>
    %9 = arith.mulf %8, %5 : vector<256x32xf32>
    %10 = arith.select %7, %5, %9 : vector<256x32xi1>, vector<256x32xf32>
    %c0_6 = arith.constant 0 : index
    %c0_7 = arith.constant 0 : index
    %11 = vector.load %arg7[%c0_6, %c0_7] : memref<32x8xf32, #tpu.memory_space<vmem>>, vector<32x8xf32>
    %cst_8 = arith.constant dense<0.000000e+00> : vector<256x8xf32>
    %12 = tpu.matmul %10, %11, %cst_8 {dimension_numbers = #tpu.dot_dimension_numbers<[1], [0], [0], [1], [0, 0, 1, 1], [], []>} : vector<256x32xf32>, vector<32x8xf32>, vector<256x8xf32> -> vector<256x8xf32>
    %c0_9 = arith.constant 0 : index
    %c0_10 = arith.constant 0 : index
    %13 = vector.load %arg5[%c0_9, %c0_10] : memref<256x8xf32, #tpu.memory_space<vmem>>, vector<256x8xf32>
    %14 = arith.addf %12, %13 : vector<256x8xf32>
    %cst_11 = arith.constant dense<0xFF800000> : vector<8xf32>
    %15 = vector.multi_reduction <maximumf>, %14, %cst_11 [0] : vector<256x8xf32> to vector<8xf32>
    %16 = vector.shape_cast %15 : vector<8xf32> to vector<1x8xf32>
    %c0_12 = arith.constant 0 : index
    %c0_13 = arith.constant 0 : index
    %17 = vector.load %arg10[%c0_12, %c0_13] : memref<1x8xf32, #tpu.memory_space<vmem>>, vector<1x8xf32>
    %18 = arith.maximumf %17, %16 : vector<1x8xf32>
    %c0_14 = arith.constant 0 : index
    %c0_15 = arith.constant 0 : index
    %19 = vector.load %arg10[%c0_14, %c0_15] : memref<1x8xf32, #tpu.memory_space<vmem>>, vector<1x8xf32>
    %20 = arith.subf %19, %18 : vector<1x8xf32>
    %21 = math.exp %20 : vector<1x8xf32>
    %c0_16 = arith.constant 0 : index
    %c0_17 = arith.constant 0 : index
    %22 = vector.load %arg10[%c0_16, %c0_17] : memref<1x8xf32, #tpu.memory_space<vmem>>, vector<1x8xf32>
    tpu.vector_store %arg10[%c0_16, %c0_17], %18 {strides = array<i32>} : memref<1x8xf32, #tpu.memory_space<vmem>>, vector<1x8xf32>,
    %23 = vector.broadcast %18 : vector<1x8xf32> to vector<256x8xf32>
    %24 = arith.subf %14, %23 : vector<256x8xf32>
    %25 = math.exp %24 : vector<256x8xf32>
    %26 = arith.truncf %25 : vector<256x8xf32> to vector<256x8xbf16>
    %c32_i32 = arith.constant 32 : i32
    %27 = arith.muli %arg0, %c32_i32 : i32
    %28 = tpu.iota {dimensions = array<i32: 0>} : vector<32x256xi32>
    %c0_18 = arith.constant 0 : index
    %c0_19 = arith.constant 0 : index
    %29 = vector.load %arg6[%c0_18, %c0_19] : memref<1x256xi32, #tpu.memory_space<vmem>>, vector<1x256xi32>
    %30 = vector.broadcast %27 : i32 to vector<1x256xi32>
    %31 = arith.subi %29, %30 : vector<1x256xi32>
    %32 = vector.broadcast %31 : vector<1x256xi32> to vector<32x256xi32>
    %33 = arith.cmpi eq, %28, %32 : vector<32x256xi32>
    %34 = arith.extui %33 : vector<32x256xi1> to vector<32x256xi32>
    %35 = arith.sitofp %34 : vector<32x256xi32> to vector<32x256xf32>
    %36 = arith.truncf %35 : vector<32x256xf32> to vector<32x256xbf16>
    %cst_20 = arith.constant dense<0.000000e+00> : vector<32x8xf32>
    %37 = tpu.matmul %36, %26, %cst_20 {dimension_numbers = #tpu.dot_dimension_numbers<[1], [0], [0], [1], [0, 0, 1, 1], [], []>} : vector<32x256xbf16>, vector<256x8xbf16>, vector<32x8xf32> -> vector<32x8xf32>
    %c0_21 = arith.constant 0 : index
    %c0_22 = arith.constant 0 : index
    %38 = vector.load %arg11[%c0_21, %c0_22] : memref<32x8xf32, #tpu.memory_space<vmem>>, vector<32x8xf32>
    %39 = vector.broadcast %21 : vector<1x8xf32> to vector<32x8xf32>
    %40 = arith.mulf %38, %39 : vector<32x8xf32>
    %41 = arith.addf %40, %37 : vector<32x8xf32>
    %c0_23 = arith.constant 0 : index
    %c0_24 = arith.constant 0 : index
    %42 = vector.load %arg11[%c0_23, %c0_24] : memref<32x8xf32, #tpu.memory_space<vmem>>, vector<32x8xf32>
    tpu.vector_store %arg11[%c0_23, %c0_24], %41 {strides = array<i32>} : memref<32x8xf32, #tpu.memory_space<vmem>>, vector<32x8xf32>,
    %c0_25 = arith.constant 0 : index
    %c0_26 = arith.constant 0 : index
    %43 = vector.load %arg8[%c0_25, %c0_26] : memref<8x32xf32, #tpu.memory_space<vmem>>, vector<8x32xf32>
    %cst_27 = arith.constant dense<0.000000e+00> : vector<256x32xf32>
    %44 = tpu.matmul %25, %43, %cst_27 {dimension_numbers = #tpu.dot_dimension_numbers<[1], [0], [0], [1], [0, 0, 1, 1], [], []>} : vector<256x8xf32>, vector<8x32xf32>, vector<256x32xf32> -> vector<256x32xf32>
    %c0_28 = arith.constant 0 : index
    %c0_29 = arith.constant 0 : index
    %45 = vector.load %arg4[%c0_28, %c0_29] : memref<256x32xf32, #tpu.memory_space<vmem>>, vector<256x32xf32>
    %46 = arith.mulf %44, %45 : vector<256x32xf32>
    %47 = arith.truncf %46 : vector<256x32xf32> to vector<256x32xbf16>
    %cst_30 = arith.constant dense<0.000000e+00> : vector<32x32xf32>
    %48 = tpu.matmul %36, %47, %cst_30 {dimension_numbers = #tpu.dot_dimension_numbers<[1], [0], [0], [1], [0, 0, 1, 1], [], []>} : vector<32x256xbf16>, vector<256x32xbf16>, vector<32x32xf32> -> vector<32x32xf32>
    %c0_31 = arith.constant 0 : index
    %c0_32 = arith.constant 0 : index
    %49 = vector.load %arg8[%c0_31, %c0_32] : memref<8x32xf32, #tpu.memory_space<vmem>>, vector<8x32xf32>
    %cst_33 = arith.constant dense<0.000000e+00> : vector<1x32xf32>
    %50 = tpu.matmul %21, %49, %cst_33 {dimension_numbers = #tpu.dot_dimension_numbers<[1], [0], [0], [1], [0, 0, 1, 1], [], []>} : vector<1x8xf32>, vector<8x32xf32>, vector<1x32xf32> -> vector<1x32xf32>
    %c0_34 = arith.constant 0 : index
    %c0_35 = arith.constant 0 : index
    %51 = vector.load %arg9[%c0_34, %c0_35] : memref<32x32xf32, #tpu.memory_space<vmem>>, vector<32x32xf32>
    %52 = vector.broadcast %50 : vector<1x32xf32> to vector<32x32xf32>
    %53 = arith.mulf %51, %52 : vector<32x32xf32>
    %54 = arith.addf %53, %48 : vector<32x32xf32>
    %c0_36 = arith.constant 0 : index
    %c0_37 = arith.constant 0 : index
    %55 = vector.load %arg9[%c0_36, %c0_37] : memref<32x32xf32, #tpu.memory_space<vmem>>, vector<32x32xf32>
    tpu.vector_store %arg9[%c0_36, %c0_37], %54 {strides = array<i32>} : memref<32x32xf32, #tpu.memory_space<vmem>>, vector<32x32xf32>,
    %c2_i32 = arith.constant 2 : i32
    %56 = arith.cmpi eq, %arg1, %c2_i32 : i32
    %57 = arith.extui %56 : i1 to i32
    %c0_i32_38 = arith.constant 0 : i32
    %58 = arith.cmpi ne, %57, %c0_i32_38 : i32
    scf.if %58 {
      %c0_39 = arith.constant 0 : index
      %c0_40 = arith.constant 0 : index
      %59 = vector.load %arg11[%c0_39, %c0_40] : memref<32x8xf32, #tpu.memory_space<vmem>>, vector<32x8xf32>
      %c0_41 = arith.constant 0 : index
      %c0_42 = arith.constant 0 : index
      %60 = vector.load %arg8[%c0_41, %c0_42] : memref<8x32xf32, #tpu.memory_space<vmem>>, vector<8x32xf32>
      %cst_43 = arith.constant dense<0.000000e+00> : vector<32x32xf32>
      %61 = tpu.matmul %59, %60, %cst_43 {dimension_numbers = #tpu.dot_dimension_numbers<[1], [0], [0], [1], [0, 0, 1, 1], [], []>} : vector<32x8xf32>, vector<8x32xf32>, vector<32x32xf32> -> vector<32x32xf32>
      %cst_44 = arith.constant 1.000000e-16 : f32
      %62 = vector.broadcast %cst_44 : f32 to vector<32x32xf32>
      %63 = arith.addf %61, %62 : vector<32x32xf32>
      %64 = tpu.reciprocal %63 {approx = true} : vector<32x32xf32> -> vector<32x32xf32>
      %65 = arith.mulf %63, %64 : vector<32x32xf32>
      %cst_45 = arith.constant 2.000000e+00 : f32
      %66 = vector.broadcast %cst_45 : f32 to vector<32x32xf32>
      %67 = arith.subf %66, %65 : vector<32x32xf32>
      %68 = arith.mulf %64, %67 : vector<32x32xf32>
      %c0_46 = arith.constant 0 : index
      %c0_47 = arith.constant 0 : index
      %69 = vector.load %arg9[%c0_46, %c0_47] : memref<32x32xf32, #tpu.memory_space<vmem>>, vector<32x32xf32>
      %70 = arith.mulf %69, %68 : vector<32x32xf32>
      %c0_48 = arith.constant 0 : index
      %c0_49 = arith.constant 0 : index
      %71 = vector.load %arg9[%c0_48, %c0_49] : memref<32x32xf32, #tpu.memory_space<vmem>>, vector<32x32xf32>
      tpu.vector_store %arg9[%c0_48, %c0_49], %70 {strides = array<i32>} : memref<32x32xf32, #tpu.memory_space<vmem>>, vector<32x32xf32>,
    } else {
    }
    return
  }
  func.func @transform_0(%arg0: i32, %arg1: i32) -> (i32, i32) {
    %c0_i32 = arith.constant 0 : i32
    %c0_i32_0 = arith.constant 0 : i32
    return %arg1, %c0_i32 : i32, i32
  }
  func.func @transform_1(%arg0: i32, %arg1: i32) -> (i32, i32) {
    %c0_i32 = arith.constant 0 : i32
    %c0_i32_0 = arith.constant 0 : i32
    return %arg1, %c0_i32 : i32, i32
  }
  func.func @transform_2(%arg0: i32, %arg1: i32) -> (i32, i32) {
    %c0_i32 = arith.constant 0 : i32
    %c0_i32_0 = arith.constant 0 : i32
    return %arg1, %c0_i32 : i32, i32
  }
  func.func @transform_3(%arg0: i32, %arg1: i32) -> (i32, i32) {
    %c0_i32 = arith.constant 0 : i32
    %c0_i32_0 = arith.constant 0 : i32
    return %arg1, %c0_i32 : i32, i32
  }
  func.func @transform_4(%arg0: i32, %arg1: i32) -> (i32, i32) {
    %c0_i32 = arith.constant 0 : i32
    %c0_i32_0 = arith.constant 0 : i32
    return %c0_i32, %arg1 : i32, i32
  }
  func.func @transform_5(%arg0: i32, %arg1: i32) -> (i32, i32) {
    %c0_i32 = arith.constant 0 : i32
    %c0_i32_0 = arith.constant 0 : i32
    %c0_i32_1 = arith.constant 0 : i32
    return %c0_i32, %c0_i32_0 : i32, i32
  }
  func.func @transform_6(%arg0: i32, %arg1: i32) -> (i32, i32) {
    %c0_i32 = arith.constant 0 : i32
    %c0_i32_0 = arith.constant 0 : i32
    %c0_i32_1 = arith.constant 0 : i32
    return %c0_i32, %c0_i32_0 : i32, i32
  }
  func.func @transform_7(%arg0: i32, %arg1: i32) -> (i32, i32) {
    %c0_i32 = arith.constant 0 : i32
    %c0_i32_0 = arith.constant 0 : i32
    return %arg0, %c0_i32 : i32, i32
  }
}

</mosaic_0001>

<llo_original>
// kernel: mul.5
$region0: #{mul.5}
  %s0 = inlined_call_operand.vmem [shape: f32[1,8,4], index: 0, kind: input, shape index: {}]
  %s1 = inlined_call_operand.vmem [shape: f32[32], index: 1, kind: output, shape index: {}]
  $region1: #{mul.5} parent=0
    #allocation0 [shape = 'u8[4096]{0}', space=vmem, size = 0x1000, scoped, tag = 'scoped mem for output reshape']
    %v2 = vld [vmem:[%s0] sm:$0x1]
    %vm3 = vcmask 31744
    %4 = vst.msk [vmem:[#allocation0] sm:$0x1] %vm3, %v2
    %s5 = scalar_lea.vmem %s0, 7
    %v6 = vld [vmem:[%s5] sm:$0x1]
    %7 = vrot.lane.b32.xlu0 %v6, 28
    %v8 = vpop.permute.xlu0 %7
    %vm9 = vcmask 261344
    %10 = vst.msk [vmem:[#allocation0] sm:$0x1] %vm9, %v8
    %s11 = scalar_lea.vmem %s0, 6
    %v12 = vld [vmem:[%s11] sm:$0x1]
    %13 = vrot.lane.b32.xlu0 %v12, 24
    %v14 = vpop.permute.xlu0 %13
    %vm15 = vcmask 228544
    %16 = vst.msk [vmem:[#allocation0] sm:$0x1] %vm15, %v14
    %s17 = scalar_lea.vmem %s0, 5
    %v18 = vld [vmem:[%s17] sm:$0x1]
    %19 = vrot.lane.b32.xlu0 %v18, 20
    %v20 = vpop.permute.xlu0 %19
    %vm21 = vcmask 195744
    %22 = vst.msk [vmem:[#allocation0] sm:$0x1] %vm21, %v20
    %s23 = scalar_lea.vmem %s0, 4
    %v24 = vld [vmem:[%s23] sm:$0x1]
    %25 = vrot.lane.b32.xlu0 %v24, 16
    %v26 = vpop.permute.xlu0 %25
    %vm27 = vcmask 162944
    %28 = vst.msk [vmem:[#allocation0] sm:$0x1] %vm27, %v26
    %s29 = scalar_lea.vmem %s0, 3
    %v30 = vld [vmem:[%s29] sm:$0x1]
    %31 = vrot.lane.b32.xlu0 %v30, 12
    %v32 = vpop.permute.xlu0 %31
    %vm33 = vcmask 130144
    %34 = vst.msk [vmem:[#allocation0] sm:$0x1] %vm33, %v32
    %s35 = scalar_lea.vmem %s0, 2
    %v36 = vld [vmem:[%s35] sm:$0x1]
    %37 = vrot.lane.b32.xlu0 %v36, 8
    %v38 = vpop.permute.xlu0 %37
    %vm39 = vcmask 97344
    %40 = vst.msk [vmem:[#allocation0] sm:$0x1] %vm39, %v38
    %s41 = scalar_lea.vmem %s0, 1
    %v42 = vld [vmem:[%s41] sm:$0x1]
    %43 = vrot.lane.b32.xlu0 %v42, 4
    %v44 = vpop.permute.xlu0 %43
    %vm45 = vcmask 64544
    %46 = vst.msk [vmem:[#allocation0] sm:$0x1] %vm45, %v44
    %s48 = sshllo.u32 0, 1
    %v50 = vld [vmem:[#allocation0] sm:%s48]
    %s51 = sshllo.u32 0, 1
    %52 = vst [vmem:[%s1] sm:%s51] %v50

// kernel: ingram_relation_forward.2
$region0: #{ingram_relation_forward.2}
  #allocation0 [shape = 'u32[]', space=smem, size = 0x4, offset = 0x4, fixed_abs, tag = 'smem constant byte address 0x4 - core index']
  #allocation1 [shape = 'u32[144,128]{1,0:T(1,128)}', space=vmem, size = 0x12000, scoped, tag = 'internal scratch']
  %s0 = inlined_call_operand.vmem [shape: f32[64,32], index: 0, kind: input, shape index: {}]
  %s1 = inlined_call_operand.vmem [shape: f32[32,96], index: 1, kind: input, shape index: {}]
  %s2 = inlined_call_operand.vmem [shape: f32[1,96], index: 2, kind: input, shape index: {}]
  %s3 = inlined_call_operand.vmem [shape: f32[64,96], index: 3, kind: output, shape index: {}]
  %s4 = sld [smem:[#allocation0]]
  $region22: #{ingram_relation_forward.2} parent=0
    _
  %s6 = ssub.s32 1, %s4
  %s7 = scalar_select 0, %s6, %s4
  // Predicated region
  $region2: #{ingram_relation_forward.2} parent=0 // pred_check
    _
  $region3: #{ingram_relation_forward.2} parent=0 // pred_check_branch
    %9 = sbr.rel (0) target = $region5
  $region4: #{ingram_relation_forward.2} parent=0 // pred_region
    _
  $region5: #{ingram_relation_forward.2} parent=0 // pred_fallthru
    _
  // Predicated region
  $region6: #{ingram_relation_forward.2} parent=0 // pred_check
    _
  $region7: #{ingram_relation_forward.2} parent=0 // pred_check_branch
    %11 = sbr.rel (0) target = $region9
  $region8: #{ingram_relation_forward.2} parent=0 // pred_region
    _
  $region9: #{ingram_relation_forward.2} parent=0 // pred_fallthru
    _
  // Predicated region
  $region10: #{ingram_relation_forward.2} parent=0 // pred_check
    _
  $region11: #{ingram_relation_forward.2} parent=0 // pred_check_branch
    %13 = sbr.rel (0) target = $region13
  $region12: #{ingram_relation_forward.2} parent=0 // pred_region
    _
  $region13: #{ingram_relation_forward.2} parent=0 // pred_fallthru
    _
  %v14 = vld [vmem:[%s0] sm:$0xff]
  %v15 = vld [vmem:[%s0 + $0x8] sm:$0xff]
  %v16 = vld [vmem:[%s0 + $0x10] sm:$0xff]
  %v17 = vld [vmem:[%s0 + $0x18] sm:$0xff]
  %v18 = vld [vmem:[%s0 + $0x20] sm:$0xff]
  %v19 = vld [vmem:[%s0 + $0x28] sm:$0xff]
  %v20 = vld [vmem:[%s0 + $0x30] sm:$0xff]
  %v21 = vld [vmem:[%s0 + $0x38] sm:$0xff]
  %v22 = vld [vmem:[%s1] sm:$0xff]
  %v23 = vld [vmem:[%s1 + $0x8] sm:$0xff]
  %v24 = vld [vmem:[%s1 + $0x10] sm:$0xff]
  %v25 = vld [vmem:[%s1 + $0x18] sm:$0xff]
  %v26 = vld [vmem:[%s2] sm:$0x1]
  %v28 = vlaneseq
  %v29 = vshrl.u32 %v28, 7
  %v30 = vsub.s32 0, %v29
  %v31 = vrot.slane %v26, %v30
  %vm33 = vcmask 261120
  %v35 = vsel %vm33, %v14, 0
  %v38 = vsel %vm33, %v15, 0
  %v41 = vsel %vm33, %v16, 0
  %v44 = vsel %vm33, %v17, 0
  %v47 = vsel %vm33, %v18, 0
  %v50 = vsel %vm33, %v19, 0
  %v53 = vsel %vm33, %v20, 0
  %v56 = vsel %vm33, %v21, 0
  %58 = vmatprep.subr.mxu0 0.0
  %59 = vmatpush1.msra.mxu0 %v22
  %60 = vmatprep.subr.mxu0 0.0
  %61 = vmatpush1.msra.mxu0 %v23
  %62 = vmatprep.subr.mxu0 0.0
  %63 = vmatpush1.msra.mxu0 %v24
  %64 = vmatprep.subr.mxu0 0.0
  %65 = vmatpush1.msra.mxu0 %v25
  %66 = vmatprep.subr.mxu0 0.0
  %67 = vmatpush1.msra.mxu0 0.0
  %68 = vmatprep.subr.mxu0 0.0
  %69 = vmatpush1.msra.mxu0 0.0
  %70 = vmatprep.subr.mxu0 0.0
  %71 = vmatpush1.msra.mxu0 0.0
  %72 = vmatprep.subr.mxu0 0.0
  %73 = vmatpush1.msra.mxu0 0.0
  %74 = vmatprep.subr.mxu0 0.0
  %75 = vmatpush1.msra.mxu0 0.0
  %76 = vmatprep.subr.mxu0 0.0
  %77 = vmatpush1.msra.mxu0 0.0
  %78 = vmatprep.subr.mxu0 0.0
  %79 = vmatpush1.msra.mxu0 0.0
  %80 = vmatprep.subr.mxu0 0.0
  %81 = vmatpush1.msra.mxu0 0.0
  %82 = vmatprep.subr.mxu0 0.0
  %83 = vmatpush1.msra.mxu0 0.0
  %84 = vmatprep.subr.mxu0 0.0
  %85 = vmatpush1.msra.mxu0 0.0
  %86 = vmatprep.subr.mxu0 0.0
  %87 = vmatpush1.msra.mxu0 0.0
  %88 = vmatprep.subr.mxu0 0.0
  %89 = vmatpush1.msra.mxu0 0.0
  %90 = vmatprep.subr.mxu0 0.0
  %91 = vmatpush1.msra.mxu0 0.0
  %92 = vmatprep.subr.mxu0 0.0
  %93 = vmatpush1.msra.mxu0 0.0
  %94 = vmatprep.subr.mxu0 0.0
  %95 = vmatpush1.msra.mxu0 0.0
  %96 = vmatprep.subr.mxu0 0.0
  %97 = vmatpush1.msra.mxu0 0.0
  %98 = vmatprep.subr.mxu0 0.0
  %99 = vmatpush1.msra.mxu0 0.0
  %100 = vmatprep.subr.mxu0 0.0
  %101 = vmatpush1.msra.mxu0 0.0
  %102 = vmatprep.subr.mxu0 0.0
  %103 = vmatpush1.msra.mxu0 0.0
  %104 = vmatprep.subr.mxu0 0.0
  %105 = vmatpush1.msra.mxu0 0.0
  %106 = vmatprep.subr.mxu0 0.0
  %107 = vmatpush1.msra.mxu0 0.0
  %108 = vmatprep.subr.mxu0 0.0
  %109 = vmatpush1.msra.mxu0 0.0
  %110 = vmatprep.subr.mxu0 0.0
  %111 = vmatpush1.msra.mxu0 0.0
  %112 = vmatprep.subr.mxu0 0.0
  %113 = vmatpush1.msra.mxu0 0.0
  %114 = vmatprep.subr.mxu0 0.0
  %115 = vmatpush1.msra.mxu0 0.0
  %116 = vmatprep.subr.mxu0 0.0
  %117 = vmatpush1.msra.mxu0 0.0
  %118 = vmatprep.subr.mxu0 0.0
  %119 = vmatpush1.msra.mxu0 0.0
  %120 = vmatprep.subr.mxu0 0.0
  %121 = vmatpush1.msra.mxu0 0.0
  %122 = vmatprep.mubr.f32.mxu0 0.0
  %123 = vmatmul.mubr.f32.gmra.mrb[0].mxu0 %v35
  %v124 = vpop.f32.mrb[0].mxu0
  %v125 = vadd.f32 %v31, %v124
  %v126 = vpop.f32.mrb[0].mxu0
  %127 = vmatprep.mubr.f32.mxu0 0.0
  %128 = vmatmul.mubr.f32.gmra.mrb[0].mxu0 %v38
  %v129 = vpop.f32.mrb[0].mxu0
  %v130 = vadd.f32 %v31, %v129
  %v131 = vpop.f32.mrb[0].mxu0
  %132 = vmatprep.mubr.f32.mxu0 0.0
  %133 = vmatmul.mubr.f32.gmra.mrb[0].mxu0 %v41
  %v134 = vpop.f32.mrb[0].mxu0
  %v135 = vadd.f32 %v31, %v134
  %v136 = vpop.f32.mrb[0].mxu0
  %137 = vmatprep.mubr.f32.mxu0 0.0
  %138 = vmatmul.mubr.f32.gmra.mrb[0].mxu0 %v44
  %v139 = vpop.f32.mrb[0].mxu0
  %v140 = vadd.f32 %v31, %v139
  %v141 = vpop.f32.mrb[0].mxu0
  %142 = vmatprep.mubr.f32.mxu0 0.0
  %143 = vmatmul.mubr.f32.gmra.mrb[0].mxu0 %v47
  %v144 = vpop.f32.mrb[0].mxu0
  %v145 = vadd.f32 %v31, %v144
  %v146 = vpop.f32.mrb[0].mxu0
  %147 = vmatprep.mubr.f32.mxu0 0.0
  %148 = vmatmul.mubr.f32.gmra.mrb[0].mxu0 %v50
  %v149 = vpop.f32.mrb[0].mxu0
  %v150 = vadd.f32 %v31, %v149
  %v151 = vpop.f32.mrb[0].mxu0
  %152 = vmatprep.mubr.f32.mxu0 0.0
  %153 = vmatmul.mubr.f32.gmra.mrb[0].mxu0 %v53
  %v154 = vpop.f32.mrb[0].mxu0
  %v155 = vadd.f32 %v31, %v154
  %v156 = vpop.f32.mrb[0].mxu0
  %157 = vmatprep.mubr.f32.mxu0 0.0
  %158 = vmatmul.mubr.f32.gmra.mrb[0].mxu0 %v56
  %v159 = vpop.f32.mrb[0].mxu0
  %v160 = vadd.f32 %v31, %v159
  %v161 = vpop.f32.mrb[0].mxu0
  %162 = vdwg.mxu0
  %vm163 = vcmask 785408
  %164 = vst.msk [vmem:[%s3] sm:$0xff] %vm163, %v125
  %165 = vst.msk [vmem:[%s3 + $0x8] sm:$0xff] %vm163, %v130
  %166 = vst.msk [vmem:[%s3 + $0x10] sm:$0xff] %vm163, %v135
  %167 = vst.msk [vmem:[%s3 + $0x18] sm:$0xff] %vm163, %v140
  %168 = vst.msk [vmem:[%s3 + $0x20] sm:$0xff] %vm163, %v145
  %169 = vst.msk [vmem:[%s3 + $0x28] sm:$0xff] %vm163, %v150
  %170 = vst.msk [vmem:[%s3 + $0x30] sm:$0xff] %vm163, %v155
  %171 = vst.msk [vmem:[%s3 + $0x38] sm:$0xff] %vm163, %v160
  // Predicated region
  $region14: #{ingram_relation_forward.2} parent=0 // pred_check
    _
  $region15: #{ingram_relation_forward.2} parent=0 // pred_check_branch
    %173 = sbr.rel (0) target = $region17
  $region16: #{ingram_relation_forward.2} parent=0 // pred_region
    _
  $region17: #{ingram_relation_forward.2} parent=0 // pred_fallthru
    _
  // Predicated region
  $region18: #{ingram_relation_forward.2} parent=0 // pred_check
    _
  $region19: #{ingram_relation_forward.2} parent=0 // pred_check_branch
    %175 = sbr.rel (0) target = $region21
  $region20: #{ingram_relation_forward.2} parent=0 // pred_region
    _
  $region21: #{ingram_relation_forward.2} parent=0 // pred_fallthru
    _

// kernel: ingram_relation_forward.3
$region0: #{ingram_relation_forward.3}
  #allocation0 [shape = 'u32[]', space=smem, size = 0x4, offset = 0x4, fixed_abs, tag = 'smem constant byte address 0x4 - core index']
  #allocation1 [shape = 'u32[144,128]{1,0:T(1,128)}', space=vmem, size = 0x12000, scoped, tag = 'internal scratch']
  #allocation2 [shape = 'f32[1,8]{1,0:T(1,128)}', space=vmem, size = 0x200, scoped, tag = 'scratch operand']
  #allocation3 [shape = 'f32[32,8]{1,0:T(8,128)}', space=vmem, size = 0x4000, scoped, tag = 'scratch operand']
  %s0 = inlined_call_operand.vmem [shape: f32[768,32], index: 0, kind: input, shape index: {}]
  %s1 = inlined_call_operand.vmem [shape: f32[768,32], index: 1, kind: input, shape index: {}]
  %s2 = inlined_call_operand.vmem [shape: f32[768,32], index: 2, kind: input, shape index: {}]
  %s3 = inlined_call_operand.vmem [shape: f32[768,8], index: 3, kind: input, shape index: {}]
  %s4 = inlined_call_operand.vmem [shape: s32[1,768], index: 4, kind: input, shape index: {}]
  %s5 = inlined_call_operand.vmem [shape: f32[32,8], index: 5, kind: input, shape index: {}]
  %s6 = inlined_call_operand.vmem [shape: f32[8,32], index: 6, kind: input, shape index: {}]
  %s7 = inlined_call_operand.vmem [shape: f32[64,32], index: 7, kind: output, shape index: {}]
  %s8 = sld [smem:[#allocation0]]
  $region69: #{ingram_relation_forward.3} parent=0
    _
  %s10 = ssub.s32 1, %s8
  %s11 = scalar_select 0, %s10, %s8
  loop: start=0, step=1, limit=8
  $region2: #{ingram_relation_forward.3} parent=0 // loop_pre_header
    _
  $region3: #{ingram_relation_forward.3} parent=0 // loop_header
    %s13 = sphi 0, %s17
    %p14 = scmp.ge.s32.totalorder %s13, 8
    %s20 = sphi 0, %s32
    %s21 = sphi 0, %s28
    %s22 = sphi 0, %s20
    %s23 = sphi 0, %s21
    %s24 = sphi 0, %s22
    %s25 = sphi 0, %s23
    %s35 = sphi 0, %s37
    %s38 = sphi 0, %s35
    %s39 = sphi 0, %s38
    %s55 = sphi 0, %s39
    %s61 = sphi 0, %s63
    %s64 = sphi 0, %s61
    %s65 = sphi 0, %s64
    %s81 = sphi 0, %s65
    %s87 = sphi 0, %s89
    %s90 = sphi 0, %s87
    %s91 = sphi 0, %s90
    %s107 = sphi 0, %s91
    %s113 = sphi 0, %s115
    %s116 = sphi 0, %s113
    %s117 = sphi 0, %s116
    %s133 = sphi 0, %s117
    %s139 = sphi 0, %s141
    %s142 = sphi 0, %s139
    %s143 = sphi 0, %s142
    %s159 = sphi 0, %s143
    %s163 = sphi 0, %s163
    %s165 = sphi 0, %s163
    %s166 = sphi 0, %s165
    %s180 = sphi 0, %s166
    %s184 = sphi 0, %s184
    %s186 = sphi 0, %s184
    %s187 = sphi 0, %s186
    %s201 = sphi 0, %s187
    %s207 = sphi 0, %s209
    %s210 = sphi 0, %s207
    %s211 = sphi 0, %s210
    %s227 = sphi 0, %s211
  $region4: #{ingram_relation_forward.3} parent=0 // loop_header_branch
    %16 = sbr.rel (%p14) target = $region8
  $region5: #{ingram_relation_forward.3} parent=0 // loop_body
    %s18 = ssub.s32 %s13, 1
    %s19 = ssub.s32 %s13, 2
    %s26 = sadd.s32 1, %s21
    %p27 = scmp.ge.s32.totalorder %s26, 3
    %s28 = scalar_select %p27, 0, %s26
    %s29 = sadd.s32 1, %s20
    %s30 = scalar_select %p27, %s29, %s20
    %p31 = scmp.ge.s32.totalorder %s30, 2
    %s32 = scalar_select %p31, 0, %s30
    %s33 = ssub.s32 %s21, %s28
    %p34 = scmp.eq.s32.totalorder %s33, 0
    %s36 = sadd.s32 %s35, 1
    %s37 = scalar_select %p34, %s35, %s36
    %p40 = pneg %p34
    %p41 = scmp.eq.s32.totalorder %s13, 5
    %p42 = por %p40, %p41
    %p43 = scmp.ne.s32.totalorder %s35, %s38
    %p44 = scmp.eq.s32.totalorder %s13, 0
    %p45 = por %p43, %p44
    %p46 = scmp.ne.s32.totalorder %s35, %s38
    %p47 = scmp.eq.s32.totalorder %s18, 5
    %p48 = por %p46, %p47
    %p49 = scmp.ne.s32.totalorder %s38, %s39
    %p50 = scmp.eq.s32.totalorder %s18, 0
    %p51 = por %p49, %p50
    %p52 = scmp.ne.s32.totalorder %s38, %s39
    %p53 = scmp.eq.s32.totalorder %s19, 5
    %p54 = por %p52, %p53
    %p56 = scmp.ne.s32.totalorder %s39, %s55
    %p57 = scmp.eq.s32.totalorder %s19, 0
    %p58 = por %p56, %p57
    %s59 = ssub.s32 %s21, %s28
    %p60 = scmp.eq.s32.totalorder %s59, 0
    %s62 = sadd.s32 %s61, 1
    %s63 = scalar_select %p60, %s61, %s62
    %p66 = pneg %p60
    %p67 = scmp.eq.s32.totalorder %s13, 5
    %p68 = por %p66, %p67
    %p69 = scmp.ne.s32.totalorder %s61, %s64
    %p70 = scmp.eq.s32.totalorder %s13, 0
    %p71 = por %p69, %p70
    %p72 = scmp.ne.s32.totalorder %s61, %s64
    %p73 = scmp.eq.s32.totalorder %s18, 5
    %p74 = por %p72, %p73
    %p75 = scmp.ne.s32.totalorder %s64, %s65
    %p76 = scmp.eq.s32.totalorder %s18, 0
    %p77 = por %p75, %p76
    %p78 = scmp.ne.s32.totalorder %s64, %s65
    %p79 = scmp.eq.s32.totalorder %s19, 5
    %p80 = por %p78, %p79
    %p82 = scmp.ne.s32.totalorder %s65, %s81
    %p83 = scmp.eq.s32.totalorder %s19, 0
    %p84 = por %p82, %p83
    %s85 = ssub.s32 %s21, %s28
    %p86 = scmp.eq.s32.totalorder %s85, 0
    %s88 = sadd.s32 %s87, 1
    %s89 = scalar_select %p86, %s87, %s88
    %p92 = pneg %p86
    %p93 = scmp.eq.s32.totalorder %s13, 5
    %p94 = por %p92, %p93
    %p95 = scmp.ne.s32.totalorder %s87, %s90
    %p96 = scmp.eq.s32.totalorder %s13, 0
    %p97 = por %p95, %p96
    %p98 = scmp.ne.s32.totalorder %s87, %s90
    %p99 = scmp.eq.s32.totalorder %s18, 5
    %p100 = por %p98, %p99
    %p101 = scmp.ne.s32.totalorder %s90, %s91
    %p102 = scmp.eq.s32.totalorder %s18, 0
    %p103 = por %p101, %p102
    %p104 = scmp.ne.s32.totalorder %s90, %s91
    %p105 = scmp.eq.s32.totalorder %s19, 5
    %p106 = por %p104, %p105
    %p108 = scmp.ne.s32.totalorder %s91, %s107
    %p109 = scmp.eq.s32.totalorder %s19, 0
    %p110 = por %p108, %p109
    %s111 = ssub.s32 %s21, %s28
    %p112 = scmp.eq.s32.totalorder %s111, 0
    %s114 = sadd.s32 %s113, 1
    %s115 = scalar_select %p112, %s113, %s114
    %p118 = pneg %p112
    %p119 = scmp.eq.s32.totalorder %s13, 5
    %p120 = por %p118, %p119
    %p121 = scmp.ne.s32.totalorder %s113, %s116
    %p122 = scmp.eq.s32.totalorder %s13, 0
    %p123 = por %p121, %p122
    %p124 = scmp.ne.s32.totalorder %s113, %s116
    %p125 = scmp.eq.s32.totalorder %s18, 5
    %p126 = por %p124, %p125
    %p127 = scmp.ne.s32.totalorder %s116, %s117
    %p128 = scmp.eq.s32.totalorder %s18, 0
    %p129 = por %p127, %p128
    %p130 = scmp.ne.s32.totalorder %s116, %s117
    %p131 = scmp.eq.s32.totalorder %s19, 5
    %p132 = por %p130, %p131
    %p134 = scmp.ne.s32.totalorder %s117, %s133
    %p135 = scmp.eq.s32.totalorder %s19, 0
    %p136 = por %p134, %p135
    %s137 = ssub.s32 %s21, %s28
    %p138 = scmp.eq.s32.totalorder %s137, 0
    %s140 = sadd.s32 %s139, 1
    %s141 = scalar_select %p138, %s139, %s140
    %p144 = pneg %p138
    %p145 = scmp.eq.s32.totalorder %s13, 5
    %p146 = por %p144, %p145
    %p147 = scmp.ne.s32.totalorder %s139, %s142
    %p148 = scmp.eq.s32.totalorder %s13, 0
    %p149 = por %p147, %p148
    %p150 = scmp.ne.s32.totalorder %s139, %s142
    %p151 = scmp.eq.s32.totalorder %s18, 5
    %p152 = por %p150, %p151
    %p153 = scmp.ne.s32.totalorder %s142, %s143
    %p154 = scmp.eq.s32.totalorder %s18, 0
    %p155 = por %p153, %p154
    %p156 = scmp.ne.s32.totalorder %s142, %s143
    %p157 = scmp.eq.s32.totalorder %s19, 5
    %p158 = por %p156, %p157
    %p160 = scmp.ne.s32.totalorder %s143, %s159
    %p161 = scmp.eq.s32.totalorder %s19, 0
    %p162 = por %p160, %p161
    %s164 = sadd.s32 %s163, 1
    %p167 = scmp.eq.s32.totalorder %s13, 5
    %p168 = scmp.ne.s32.totalorder %s163, %s165
    %p169 = scmp.eq.s32.totalorder %s13, 0
    %p170 = por %p168, %p169
    %p171 = scmp.ne.s32.totalorder %s163, %s165
    %p172 = scmp.eq.s32.totalorder %s18, 5
    %p173 = por %p171, %p172
    %p174 = scmp.ne.s32.totalorder %s165, %s166
    %p175 = scmp.eq.s32.totalorder %s18, 0
    %p176 = por %p174, %p175
    %p177 = scmp.ne.s32.totalorder %s165, %s166
    %p178 = scmp.eq.s32.totalorder %s19, 5
    %p179 = por %p177, %p178
    %p181 = scmp.ne.s32.totalorder %s166, %s180
    %p182 = scmp.eq.s32.totalorder %s19, 0
    %p183 = por %p181, %p182
    %s185 = sadd.s32 %s184, 1
    %p188 = scmp.eq.s32.totalorder %s13, 5
    %p189 = scmp.ne.s32.totalorder %s184, %s186
    %p190 = scmp.eq.s32.totalorder %s13, 0
    %p191 = por %p189, %p190
    %p192 = scmp.ne.s32.totalorder %s184, %s186
    %p193 = scmp.eq.s32.totalorder %s18, 5
    %p194 = por %p192, %p193
    %p195 = scmp.ne.s32.totalorder %s186, %s187
    %p196 = scmp.eq.s32.totalorder %s18, 0
    %p197 = por %p195, %p196
    %p198 = scmp.ne.s32.totalorder %s186, %s187
    %p199 = scmp.eq.s32.totalorder %s19, 5
    %p200 = por %p198, %p199
    %p202 = scmp.ne.s32.totalorder %s187, %s201
    %p203 = scmp.eq.s32.totalorder %s19, 0
    %p204 = por %p202, %p203
    %s205 = ssub.s32 %s20, %s32
    %p206 = scmp.eq.s32.totalorder %s205, 0
    %s208 = sadd.s32 %s207, 1
    %s209 = scalar_select %p206, %s207, %s208
    %p212 = pneg %p206
    %p213 = scmp.eq.s32.totalorder %s13, 5
    %p214 = por %p212, %p213
    %p215 = scmp.ne.s32.totalorder %s207, %s210
    %p216 = scmp.eq.s32.totalorder %s13, 0
    %p217 = por %p215, %p216
    %p218 = scmp.ne.s32.totalorder %s207, %s210
    %p219 = scmp.eq.s32.totalorder %s18, 5
    %p220 = por %p218, %p219
    %p221 = scmp.ne.s32.totalorder %s210, %s211
    %p222 = scmp.eq.s32.totalorder %s18, 0
    %p223 = por %p221, %p222
    %p224 = scmp.ne.s32.totalorder %s210, %s211
    %p225 = scmp.eq.s32.totalorder %s19, 5
    %p226 = por %p224, %p225
    %p228 = scmp.ne.s32.totalorder %s211, %s227
    %p229 = scmp.eq.s32.totalorder %s19, 0
    %p230 = por %p228, %p229
    %p231 = scmp.le.s32.totalorder 1, %s13
    %p232 = scmp.lt.s32.totalorder %s13, 7
    %p233 = pnand %p231, %p232
    %p234 = pneg %p233
    // Predicated region
    $region9: #{ingram_relation_forward.3} parent=5 // pred_check
      _
    $region10: #{ingram_relation_forward.3} parent=5 // pred_check_branch
      %236 = sbr.rel (%p233) target = $region12
    $region11: #{ingram_relation_forward.3} parent=5 // pred_region
      %s237 = ssub.s32 %s13, 1
      // Predicated region
      $region13: #{ingram_relation_forward.3} parent=11 // pred_check
        %p238 = pneg %p176
      $region14: #{ingram_relation_forward.3} parent=11 // pred_check_branch
        %240 = sbr.rel (%p238) target = $region16
      $region15: #{ingram_relation_forward.3} parent=11 // pred_region
        _
      $region16: #{ingram_relation_forward.3} parent=11 // pred_fallthru
        _
      // Predicated region
      $region17: #{ingram_relation_forward.3} parent=11 // pred_check
        %p241 = pneg %p197
      $region18: #{ingram_relation_forward.3} parent=11 // pred_check_branch
        %243 = sbr.rel (%p241) target = $region20
      $region19: #{ingram_relation_forward.3} parent=11 // pred_region
        _
      $region20: #{ingram_relation_forward.3} parent=11 // pred_fallthru
        _
    $region12: #{ingram_relation_forward.3} parent=5 // pred_fallthru
      _
    %p244 = scmp.lt.s32.totalorder %s13, 6
    // Predicated region
    $region21: #{ingram_relation_forward.3} parent=5 // pred_check
      %p245 = pneg %p244
    $region22: #{ingram_relation_forward.3} parent=5 // pred_check_branch
      %247 = sbr.rel (%p245) target = $region24
    $region23: #{ingram_relation_forward.3} parent=5 // pred_region
      // Predicated region
      $region25: #{ingram_relation_forward.3} parent=23 // pred_check
        %p248 = pneg %p45
      $region26: #{ingram_relation_forward.3} parent=23 // pred_check_branch
        %250 = sbr.rel (%p248) target = $region28
      $region27: #{ingram_relation_forward.3} parent=23 // pred_region
        %s251 = smul.u32 32, %s21
        %p252 = scmp.lt.s32.totalorder %s251, 95
        %s253 = scalar_select %p252, %s251, 95
        %s254 = smul.addr %s253, 8
        %s255 = scalar_lea.vmem %s0, %s254
        %s256 = smul.u32 32, %s21
      $region28: #{ingram_relation_forward.3} parent=23 // pred_fallthru
        _
      // Predicated region
      $region29: #{ingram_relation_forward.3} parent=23 // pred_check
        %p257 = pneg %p71
      $region30: #{ingram_relation_forward.3} parent=23 // pred_check_branch
        %259 = sbr.rel (%p257) target = $region32
      $region31: #{ingram_relation_forward.3} parent=23 // pred_region
        %s260 = smul.u32 32, %s21
        %p261 = scmp.lt.s32.totalorder %s260, 95
        %s262 = scalar_select %p261, %s260, 95
        %s263 = smul.addr %s262, 8
        %s264 = scalar_lea.vmem %s1, %s263
        %s265 = smul.u32 32, %s21
      $region32: #{ingram_relation_forward.3} parent=23 // pred_fallthru
        _
      // Predicated region
      $region33: #{ingram_relation_forward.3} parent=23 // pred_check
        %p266 = pneg %p97
      $region34: #{ingram_relation_forward.3} parent=23 // pred_check_branch
        %268 = sbr.rel (%p266) target = $region36
      $region35: #{ingram_relation_forward.3} parent=23 // pred_region
        %s269 = smul.u32 32, %s21
        %p270 = scmp.lt.s32.totalorder %s269, 95
        %s271 = scalar_select %p270, %s269, 95
        %s272 = smul.addr %s271, 8
        %s273 = scalar_lea.vmem %s2, %s272
        %s274 = smul.u32 32, %s21
      $region36: #{ingram_relation_forward.3} parent=23 // pred_fallthru
        _
      // Predicated region
      $region37: #{ingram_relation_forward.3} parent=23 // pred_check
        %p275 = pneg %p123
      $region38: #{ingram_relation_forward.3} parent=23 // pred_check_branch
        %277 = sbr.rel (%p275) target = $region40
      $region39: #{ingram_relation_forward.3} parent=23 // pred_region
        %s278 = smul.u32 32, %s21
        %p279 = scmp.lt.s32.totalorder %s278, 95
        %s280 = scalar_select %p279, %s278, 95
        %s281 = smul.addr %s280, 8
        %s282 = scalar_lea.vmem %s3, %s281
        %s283 = smul.u32 32, %s21
      $region40: #{ingram_relation_forward.3} parent=23 // pred_fallthru
        _
      // Predicated region
      $region41: #{ingram_relation_forward.3} parent=23 // pred_check
        %p284 = pneg %p149
      $region42: #{ingram_relation_forward.3} parent=23 // pred_check_branch
        %286 = sbr.rel (%p284) target = $region44
      $region43: #{ingram_relation_forward.3} parent=23 // pred_region
        %s287 = smul.u32 2, %s21
        %p288 = scmp.lt.s32.totalorder %s287, 5
        %s289 = scalar_select %p288, %s287, 5
        %s290 = scalar_lea.vmem %s4, %s289
        %s291 = smul.u32 2, %s21
      $region44: #{ingram_relation_forward.3} parent=23 // pred_fallthru
        _
    $region24: #{ingram_relation_forward.3} parent=5 // pred_fallthru
      _
    %p292 = scmp.le.s32.totalorder 1, %s13
    %p293 = scmp.lt.s32.totalorder %s13, 7
    %p294 = pnand %p292, %p293
    %p295 = pneg %p294
    // Predicated region
    $region45: #{ingram_relation_forward.3} parent=5 // pred_check
      _
    $region46: #{ingram_relation_forward.3} parent=5 // pred_check_branch
      %297 = sbr.rel (%p294) target = $region48
    $region47: #{ingram_relation_forward.3} parent=5 // pred_region
      %s298 = ssub.s32 %s13, 1
      %s299 = smul.u32 32, %s23
      %p300 = scmp.lt.s32.totalorder %s299, 95
      %s301 = scalar_select %p300, %s299, 95
      %s302 = smul.addr %s301, 8
      %s303 = scalar_lea.vmem %s0, %s302
      %p304 = pneg %p51
      %p305 = pneg %p48
      %s306 = smul.u32 32, %s23
      %p307 = scmp.lt.s32.totalorder %s306, 95
      %s308 = scalar_select %p307, %s306, 95
      %s309 = smul.addr %s308, 8
      %s310 = scalar_lea.vmem %s1, %s309
      %p311 = pneg %p77
      %p312 = pneg %p74
      %s313 = smul.u32 32, %s23
      %p314 = scmp.lt.s32.totalorder %s313, 95
      %s315 = scalar_select %p314, %s313, 95
      %s316 = smul.addr %s315, 8
      %s317 = scalar_lea.vmem %s2, %s316
      %p318 = pneg %p103
      %p319 = pneg %p100
      %s320 = smul.u32 32, %s23
      %p321 = scmp.lt.s32.totalorder %s320, 95
      %s322 = scalar_select %p321, %s320, 95
      %s323 = smul.addr %s322, 8
      %s324 = scalar_lea.vmem %s3, %s323
      %p325 = pneg %p129
      %p326 = pneg %p126
      %s327 = smul.u32 2, %s23
      %p328 = scmp.lt.s32.totalorder %s327, 5
      %s329 = scalar_select %p328, %s327, 5
      %s330 = scalar_lea.vmem %s4, %s329
      %p331 = pneg %p155
      %p332 = pneg %p152
      %p333 = pneg %p176
      %p334 = pneg %p173
      %p335 = pneg %p197
      %p336 = pneg %p194
      %p337 = pneg %p223
      %p338 = pneg %p220
      %s339 = smul.u32 4, %s22
      %p340 = scmp.lt.s32.totalorder %s339, 7
      %s341 = scalar_select %p340, %s339, 7
      %s342 = smul.addr %s341, 8
      %s343 = scalar_lea.vmem %s7, %s342
      %s344 = smul.u32 32, %s23
      %p345 = scmp.lt.s32.totalorder %s344, 95
      %s346 = scalar_select %p345, %s344, 95
      %s347 = smul.addr %s346, 8
      %s348 = scalar_lea.vmem %s0, %s347
      %s349 = smul.u32 32, %s23
      %s350 = smul.u32 32, %s23
      %p351 = scmp.lt.s32.totalorder %s350, 95
      %s352 = scalar_select %p351, %s350, 95
      %s353 = smul.addr %s352, 8
      %s354 = scalar_lea.vmem %s1, %s353
      %s355 = smul.u32 32, %s23
      %s356 = smul.u32 32, %s23
      %p357 = scmp.lt.s32.totalorder %s356, 95
      %s358 = scalar_select %p357, %s356, 95
      %s359 = smul.addr %s358, 8
      %s360 = scalar_lea.vmem %s2, %s359
      %s361 = smul.u32 32, %s23
      %s362 = smul.u32 32, %s23
      %p363 = scmp.lt.s32.totalorder %s362, 95
      %s364 = scalar_select %p363, %s362, 95
      %s365 = smul.addr %s364, 8
      %s366 = scalar_lea.vmem %s3, %s365
      %s367 = smul.u32 32, %s23
      %s368 = smul.u32 2, %s23
      %p369 = scmp.lt.s32.totalorder %s368, 5
      %s370 = scalar_select %p369, %s368, 5
      %s371 = scalar_lea.vmem %s4, %s370
      %s372 = smul.u32 2, %s23
      %s373 = smul.u32 4, %s22
      %p374 = scmp.lt.s32.totalorder %s373, 7
      %s375 = scalar_select %p374, %s373, 7
      %s376 = smul.addr %s375, 8
      %s377 = scalar_lea.vmem %s7, %s376
      %s378 = smul.u32 4, %s22
      %p380 = scmp.eq.s32.totalorder %s23, 0
      // Predicated region
      $region49: #{ingram_relation_forward.3} parent=47 // pred_check
        %p381 = pneg %p380
      $region50: #{ingram_relation_forward.3} parent=47 // pred_check_branch
        %383 = sbr.rel (%p381) target = $region52
      $region51: #{ingram_relation_forward.3} parent=47 // pred_region
        %vm384 = vcmask 57344
        %385 = vst.msk [vmem:[#allocation2] sm:$0x1] %vm384, -1e+30
        %vm386 = vcmask 64512
        %387 = vst.msk [vmem:[#allocation3] sm:$0xff] %vm386, 0.0
        %388 = vst.msk [vmem:[#allocation3 + $0x8] sm:$0xff] %vm386, 0.0
        %389 = vst.msk [vmem:[#allocation3 + $0x10] sm:$0xff] %vm386, 0.0
        %390 = vst.msk [vmem:[#allocation3 + $0x18] sm:$0xff] %vm386, 0.0
        %vm391 = vcmask 261120
        %392 = vst.msk [vmem:[%s377] sm:$0xff] %vm391, 0.0
        %393 = vst.msk [vmem:[%s377 + $0x8] sm:$0xff] %vm391, 0.0
        %394 = vst.msk [vmem:[%s377 + $0x10] sm:$0xff] %vm391, 0.0
        %395 = vst.msk [vmem:[%s377 + $0x18] sm:$0xff] %vm391, 0.0
      $region52: #{ingram_relation_forward.3} parent=47 // pred_fallthru
        _
      %v396 = vld [vmem:[%s348] sm:$0xff]
      %v397 = vld [vmem:[%s348 + $0x8] sm:$0xff]
      %v398 = vld [vmem:[%s348 + $0x10] sm:$0xff]
      %v399 = vld [vmem:[%s348 + $0x18] sm:$0xff]
      %v400 = vld [vmem:[%s348 + $0x20] sm:$0xff]
      %v401 = vld [vmem:[%s348 + $0x28] sm:$0xff]
      %v402 = vld [vmem:[%s348 + $0x30] sm:$0xff]
      %v403 = vld [vmem:[%s348 + $0x38] sm:$0xff]
      %v404 = vld [vmem:[%s348 + $0x40] sm:$0xff]
      %v405 = vld [vmem:[%s348 + $0x48] sm:$0xff]
      %v406 = vld [vmem:[%s348 + $0x50] sm:$0xff]
      %v407 = vld [vmem:[%s348 + $0x58] sm:$0xff]
      %v408 = vld [vmem:[%s348 + $0x60] sm:$0xff]
      %v409 = vld [vmem:[%s348 + $0x68] sm:$0xff]
      %v410 = vld [vmem:[%s348 + $0x70] sm:$0xff]
      %v411 = vld [vmem:[%s348 + $0x78] sm:$0xff]
      %v412 = vld [vmem:[%s348 + $0x80] sm:$0xff]
      %v413 = vld [vmem:[%s348 + $0x88] sm:$0xff]
      %v414 = vld [vmem:[%s348 + $0x90] sm:$0xff]
      %v415 = vld [vmem:[%s348 + $0x98] sm:$0xff]
      %v416 = vld [vmem:[%s348 + $0xa0] sm:$0xff]
      %v417 = vld [vmem:[%s348 + $0xa8] sm:$0xff]
      %v418 = vld [vmem:[%s348 + $0xb0] sm:$0xff]
      %v419 = vld [vmem:[%s348 + $0xb8] sm:$0xff]
      %v420 = vld [vmem:[%s348 + $0xc0] sm:$0xff]
      %v421 = vld [vmem:[%s348 + $0xc8] sm:$0xff]
      %v422 = vld [vmem:[%s348 + $0xd0] sm:$0xff]
      %v423 = vld [vmem:[%s348 + $0xd8] sm:$0xff]
      %v424 = vld [vmem:[%s348 + $0xe0] sm:$0xff]
      %v425 = vld [vmem:[%s348 + $0xe8] sm:$0xff]
      %v426 = vld [vmem:[%s348 + $0xf0] sm:$0xff]
      %v427 = vld [vmem:[%s348 + $0xf8] sm:$0xff]
      %v428 = vld [vmem:[%s354] sm:$0xff]
      %v429 = vld [vmem:[%s354 + $0x8] sm:$0xff]
      %v430 = vld [vmem:[%s354 + $0x10] sm:$0xff]
      %v431 = vld [vmem:[%s354 + $0x18] sm:$0xff]
      %v432 = vld [vmem:[%s354 + $0x20] sm:$0xff]
      %v433 = vld [vmem:[%s354 + $0x28] sm:$0xff]
      %v434 = vld [vmem:[%s354 + $0x30] sm:$0xff]
      %v435 = vld [vmem:[%s354 + $0x38] sm:$0xff]
      %v436 = vld [vmem:[%s354 + $0x40] sm:$0xff]
      %v437 = vld [vmem:[%s354 + $0x48] sm:$0xff]
      %v438 = vld [vmem:[%s354 + $0x50] sm:$0xff]
      %v439 = vld [vmem:[%s354 + $0x58] sm:$0xff]
      %v440 = vld [vmem:[%s354 + $0x60] sm:$0xff]
      %v441 = vld [vmem:[%s354 + $0x68] sm:$0xff]
      %v442 = vld [vmem:[%s354 + $0x70] sm:$0xff]
      %v443 = vld [vmem:[%s354 + $0x78] sm:$0xff]
      %v444 = vld [vmem:[%s354 + $0x80] sm:$0xff]
      %v445 = vld [vmem:[%s354 + $0x88] sm:$0xff]
      %v446 = vld [vmem:[%s354 + $0x90] sm:$0xff]
      %v447 = vld [vmem:[%s354 + $0x98] sm:$0xff]
      %v448 = vld [vmem:[%s354 + $0xa0] sm:$0xff]
      %v449 = vld [vmem:[%s354 + $0xa8] sm:$0xff]
      %v450 = vld [vmem:[%s354 + $0xb0] sm:$0xff]
      %v451 = vld [vmem:[%s354 + $0xb8] sm:$0xff]
      %v452 = vld [vmem:[%s354 + $0xc0] sm:$0xff]
      %v453 = vld [vmem:[%s354 + $0xc8] sm:$0xff]
      %v454 = vld [vmem:[%s354 + $0xd0] sm:$0xff]
      %v455 = vld [vmem:[%s354 + $0xd8] sm:$0xff]
      %v456 = vld [vmem:[%s354 + $0xe0] sm:$0xff]
      %v457 = vld [vmem:[%s354 + $0xe8] sm:$0xff]
      %v458 = vld [vmem:[%s354 + $0xf0] sm:$0xff]
      %v459 = vld [vmem:[%s354 + $0xf8] sm:$0xff]
      %v460 = vadd.f32 %v396, %v428
      %v461 = vadd.f32 %v397, %v429
      %v462 = vadd.f32 %v398, %v430
      %v463 = vadd.f32 %v399, %v431
      %v464 = vadd.f32 %v400, %v432
      %v465 = vadd.f32 %v401, %v433
      %v466 = vadd.f32 %v402, %v434
      %v467 = vadd.f32 %v403, %v435
      %v468 = vadd.f32 %v404, %v436
      %v469 = vadd.f32 %v405, %v437
      %v470 = vadd.f32 %v406, %v438
      %v471 = vadd.f32 %v407, %v439
      %v472 = vadd.f32 %v408, %v440
      %v473 = vadd.f32 %v409, %v441
      %v474 = vadd.f32 %v410, %v442
      %v475 = vadd.f32 %v411, %v443
      %v476 = vadd.f32 %v412, %v444
      %v477 = vadd.f32 %v413, %v445
      %v478 = vadd.f32 %v414, %v446
      %v479 = vadd.f32 %v415, %v447
      %v480 = vadd.f32 %v416, %v448
      %v481 = vadd.f32 %v417, %v449
      %v482 = vadd.f32 %v418, %v450
      %v483 = vadd.f32 %v419, %v451
      %v484 = vadd.f32 %v420, %v452
      %v485 = vadd.f32 %v421, %v453
      %v486 = vadd.f32 %v422, %v454
      %v487 = vadd.f32 %v423, %v455
      %v488 = vadd.f32 %v424, %v456
      %v489 = vadd.f32 %v425, %v457
      %v490 = vadd.f32 %v426, %v458
      %v491 = vadd.f32 %v427, %v459
      %vm492 = vcmp.gt.f32.partialorder %v460, 0.0
      %vm493 = vcmp.gt.f32.partialorder %v461, 0.0
      %vm494 = vcmp.gt.f32.partialorder %v462, 0.0
      %vm495 = vcmp.gt.f32.partialorder %v463, 0.0
      %vm496 = vcmp.gt.f32.partialorder %v464, 0.0
      %vm497 = vcmp.gt.f32.partialorder %v465, 0.0
      %vm498 = vcmp.gt.f32.partialorder %v466, 0.0
      %vm499 = vcmp.gt.f32.partialorder %v467, 0.0
      %vm500 = vcmp.gt.f32.partialorder %v468, 0.0
      %vm501 = vcmp.gt.f32.partialorder %v469, 0.0
      %vm502 = vcmp.gt.f32.partialorder %v470, 0.0
      %vm503 = vcmp.gt.f32.partialorder %v471, 0.0
      %vm504 = vcmp.gt.f32.partialorder %v472, 0.0
      %vm505 = vcmp.gt.f32.partialorder %v473, 0.0
      %vm506 = vcmp.gt.f32.partialorder %v474, 0.0
      %vm507 = vcmp.gt.f32.partialorder %v475, 0.0
      %vm508 = vcmp.gt.f32.partialorder %v476, 0.0
      %vm509 = vcmp.gt.f32.partialorder %v477, 0.0
      %vm510 = vcmp.gt.f32.partialorder %v478, 0.0
      %vm511 = vcmp.gt.f32.partialorder %v479, 0.0
      %vm512 = vcmp.gt.f32.partialorder %v480, 0.0
      %vm513 = vcmp.gt.f32.partialorder %v481, 0.0
      %vm514 = vcmp.gt.f32.partialorder %v482, 0.0
      %vm515 = vcmp.gt.f32.partialorder %v483, 0.0
      %vm516 = vcmp.gt.f32.partialorder %v484, 0.0
      %vm517 = vcmp.gt.f32.partialorder %v485, 0.0
      %vm518 = vcmp.gt.f32.partialorder %v486, 0.0
      %vm519 = vcmp.gt.f32.partialorder %v487, 0.0
      %vm520 = vcmp.gt.f32.partialorder %v488, 0.0
      %vm521 = vcmp.gt.f32.partialorder %v489, 0.0
      %vm522 = vcmp.gt.f32.partialorder %v490, 0.0
      %vm523 = vcmp.gt.f32.partialorder %v491, 0.0
      %v524 = vmul.f32 %v460, 0.2
      %v525 = vmul.f32 %v461, 0.2
      %v526 = vmul.f32 %v462, 0.2
      %v527 = vmul.f32 %v463, 0.2
      %v528 = vmul.f32 %v464, 0.2
      %v529 = vmul.f32 %v465, 0.2
      %v530 = vmul.f32 %v466, 0.2
      %v531 = vmul.f32 %v467, 0.2
      %v532 = vmul.f32 %v468, 0.2
      %v533 = vmul.f32 %v469, 0.2
      %v534 = vmul.f32 %v470, 0.2
      %v535 = vmul.f32 %v471, 0.2
      %v536 = vmul.f32 %v472, 0.2
      %v537 = vmul.f32 %v473, 0.2
      %v538 = vmul.f32 %v474, 0.2
      %v539 = vmul.f32 %v475, 0.2
      %v540 = vmul.f32 %v476, 0.2
      %v541 = vmul.f32 %v477, 0.2
      %v542 = vmul.f32 %v478, 0.2
      %v543 = vmul.f32 %v479, 0.2
      %v544 = vmul.f32 %v480, 0.2
      %v545 = vmul.f32 %v481, 0.2
      %v546 = vmul.f32 %v482, 0.2
      %v547 = vmul.f32 %v483, 0.2
      %v548 = vmul.f32 %v484, 0.2
      %v549 = vmul.f32 %v485, 0.2
      %v550 = vmul.f32 %v486, 0.2
      %v551 = vmul.f32 %v487, 0.2
      %v552 = vmul.f32 %v488, 0.2
      %v553 = vmul.f32 %v489, 0.2
      %v554 = vmul.f32 %v490, 0.2
      %v555 = vmul.f32 %v491, 0.2
      %v556 = vsel %vm492, %v460, %v524
      %v557 = vsel %vm493, %v461, %v525
      %v558 = vsel %vm494, %v462, %v526
      %v559 = vsel %vm495, %v463, %v527
      %v560 = vsel %vm496, %v464, %v528
      %v561 = vsel %vm497, %v465, %v529
      %v562 = vsel %vm498, %v466, %v530
      %v563 = vsel %vm499, %v467, %v531
      %v564 = vsel %vm500, %v468, %v532
      %v565 = vsel %vm501, %v469, %v533
      %v566 = vsel %vm502, %v470, %v534
      %v567 = vsel %vm503, %v471, %v535
      %v568 = vsel %vm504, %v472, %v536
      %v569 = vsel %vm505, %v473, %v537
      %v570 = vsel %vm506, %v474, %v538
      %v571 = vsel %vm507, %v475, %v539
      %v572 = vsel %vm508, %v476, %v540
      %v573 = vsel %vm509, %v477, %v541
      %v574 = vsel %vm510, %v478, %v542
      %v575 = vsel %vm511, %v479, %v543
      %v576 = vsel %vm512, %v480, %v544
      %v577 = vsel %vm513, %v481, %v545
      %v578 = vsel %vm514, %v482, %v546
      %v579 = vsel %vm515, %v483, %v547
      %v580 = vsel %vm516, %v484, %v548
      %v581 = vsel %vm517, %v485, %v549
      %v582 = vsel %vm518, %v486, %v550
      %v583 = vsel %vm519, %v487, %v551
      %v584 = vsel %vm520, %v488, %v552
      %v585 = vsel %vm521, %v489, %v553
      %v586 = vsel %vm522, %v490, %v554
      %v587 = vsel %vm523, %v491, %v555
      %v588 = vld [vmem:[%s5] sm:$0xff]
      %v589 = vld [vmem:[%s5 + $0x8] sm:$0xff]
      %v590 = vld [vmem:[%s5 + $0x10] sm:$0xff]
      %v591 = vld [vmem:[%s5 + $0x18] sm:$0xff]
      %v592 = vld [vmem:[%s366] sm:$0xff]
      %v593 = vld [vmem:[%s366 + $0x8] sm:$0xff]
      %v594 = vld [vmem:[%s366 + $0x10] sm:$0xff]
      %v595 = vld [vmem:[%s366 + $0x18] sm:$0xff]
      %v596 = vld [vmem:[%s366 + $0x20] sm:$0xff]
      %v597 = vld [vmem:[%s366 + $0x28] sm:$0xff]
      %v598 = vld [vmem:[%s366 + $0x30] sm:$0xff]
      %v599 = vld [vmem:[%s366 + $0x38] sm:$0xff]
      %v600 = vld [vmem:[%s366 + $0x40] sm:$0xff]
      %v601 = vld [vmem:[%s366 + $0x48] sm:$0xff]
      %v602 = vld [vmem:[%s366 + $0x50] sm:$0xff]
      %v603 = vld [vmem:[%s366 + $0x58] sm:$0xff]
      %v604 = vld [vmem:[%s366 + $0x60] sm:$0xff]
      %v605 = vld [vmem:[%s366 + $0x68] sm:$0xff]
      %v606 = vld [vmem:[%s366 + $0x70] sm:$0xff]
      %v607 = vld [vmem:[%s366 + $0x78] sm:$0xff]
      %v608 = vld [vmem:[%s366 + $0x80] sm:$0xff]
      %v609 = vld [vmem:[%s366 + $0x88] sm:$0xff]
      %v610 = vld [vmem:[%s366 + $0x90] sm:$0xff]
      %v611 = vld [vmem:[%s366 + $0x98] sm:$0xff]
      %v612 = vld [vmem:[%s366 + $0xa0] sm:$0xff]
      %v613 = vld [vmem:[%s366 + $0xa8] sm:$0xff]
      %v614 = vld [vmem:[%s366 + $0xb0] sm:$0xff]
      %v615 = vld [vmem:[%s366 + $0xb8] sm:$0xff]
      %v616 = vld [vmem:[%s366 + $0xc0] sm:$0xff]
      %v617 = vld [vmem:[%s366 + $0xc8] sm:$0xff]
      %v618 = vld [vmem:[%s366 + $0xd0] sm:$0xff]
      %v619 = vld [vmem:[%s366 + $0xd8] sm:$0xff]
      %v620 = vld [vmem:[%s366 + $0xe0] sm:$0xff]
      %v621 = vld [vmem:[%s366 + $0xe8] sm:$0xff]
      %v622 = vld [vmem:[%s366 + $0xf0] sm:$0xff]
      %v623 = vld [vmem:[%s366 + $0xf8] sm:$0xff]
      %vm624 = vcmask 261120
      %v626 = vsel %vm624, %v556, 0
      %v629 = vsel %vm624, %v557, 0
      %v632 = vsel %vm624, %v558, 0
      %v635 = vsel %vm624, %v559, 0
      %v638 = vsel %vm624, %v560, 0
      %v641 = vsel %vm624, %v561, 0
      %v644 = vsel %vm624, %v562, 0
      %v647 = vsel %vm624, %v563, 0
      %v650 = vsel %vm624, %v564, 0
      %v653 = vsel %vm624, %v565, 0
      %v656 = vsel %vm624, %v566, 0
      %v659 = vsel %vm624, %v567, 0
      %v662 = vsel %vm624, %v568, 0
      %v665 = vsel %vm624, %v569, 0
      %v668 = vsel %vm624, %v570, 0
      %v671 = vsel %vm624, %v571, 0
      %v674 = vsel %vm624, %v572, 0
      %v677 = vsel %vm624, %v573, 0
      %v680 = vsel %vm624, %v574, 0
      %v683 = vsel %vm624, %v575, 0
      %v686 = vsel %vm624, %v576, 0
      %v689 = vsel %vm624, %v577, 0
      %v692 = vsel %vm624, %v578, 0
      %v695 = vsel %vm624, %v579, 0
      %v698 = vsel %vm624, %v580, 0
      %v701 = vsel %vm624, %v581, 0
      %v704 = vsel %vm624, %v582, 0
      %v707 = vsel %vm624, %v583, 0
      %v710 = vsel %vm624, %v584, 0
      %v713 = vsel %vm624, %v585, 0
      %v716 = vsel %vm624, %v586, 0
      %v719 = vsel %vm624, %v587, 0
      %721 = vmatprep.subr.mxu0 0.0
      %722 = vmatpush1.msra.mxu0 %v588
      %723 = vmatprep.subr.mxu0 0.0
      %724 = vmatpush1.msra.mxu0 %v589
      %725 = vmatprep.subr.mxu0 0.0
      %726 = vmatpush1.msra.mxu0 %v590
      %727 = vmatprep.subr.mxu0 0.0
      %728 = vmatpush1.msra.mxu0 %v591
      %729 = vmatprep.subr.mxu0 0.0
      %730 = vmatpush1.msra.mxu0 0.0
      %731 = vmatprep.subr.mxu0 0.0
      %732 = vmatpush1.msra.mxu0 0.0
      %733 = vmatprep.subr.mxu0 0.0
      %734 = vmatpush1.msra.mxu0 0.0
      %735 = vmatprep.subr.mxu0 0.0
      %736 = vmatpush1.msra.mxu0 0.0
      %737 = vmatprep.subr.mxu0 0.0
      %738 = vmatpush1.msra.mxu0 0.0
      %739 = vmatprep.subr.mxu0 0.0
      %740 = vmatpush1.msra.mxu0 0.0
      %741 = vmatprep.subr.mxu0 0.0
      %742 = vmatpush1.msra.mxu0 0.0
      %743 = vmatprep.subr.mxu0 0.0
      %744 = vmatpush1.msra.mxu0 0.0
      %745 = vmatprep.subr.mxu0 0.0
      %746 = vmatpush1.msra.mxu0 0.0
      %747 = vmatprep.subr.mxu0 0.0
      %748 = vmatpush1.msra.mxu0 0.0
      %749 = vmatprep.subr.mxu0 0.0
      %750 = vmatpush1.msra.mxu0 0.0
      %751 = vmatprep.subr.mxu0 0.0
      %752 = vmatpush1.msra.mxu0 0.0
      %753 = vmatprep.subr.mxu0 0.0
      %754 = vmatpush1.msra.mxu0 0.0
      %755 = vmatprep.subr.mxu0 0.0
      %756 = vmatpush1.msra.mxu0 0.0
      %757 = vmatprep.subr.mxu0 0.0
      %758 = vmatpush1.msra.mxu0 0.0
      %759 = vmatprep.subr.mxu0 0.0
      %760 = vmatpush1.msra.mxu0 0.0
      %761 = vmatprep.subr.mxu0 0.0
      %762 = vmatpush1.msra.mxu0 0.0
      %763 = vmatprep.subr.mxu0 0.0
      %764 = vmatpush1.msra.mxu0 0.0
      %765 = vmatprep.subr.mxu0 0.0
      %766 = vmatpush1.msra.mxu0 0.0
      %767 = vmatprep.subr.mxu0 0.0
      %768 = vmatpush1.msra.mxu0 0.0
      %769 = vmatprep.subr.mxu0 0.0
      %770 = vmatpush1.msra.mxu0 0.0
      %771 = vmatprep.subr.mxu0 0.0
      %772 = vmatpush1.msra.mxu0 0.0
      %773 = vmatprep.subr.mxu0 0.0
      %774 = vmatpush1.msra.mxu0 0.0
      %775 = vmatprep.subr.mxu0 0.0
      %776 = vmatpush1.msra.mxu0 0.0
      %777 = vmatprep.subr.mxu0 0.0
      %778 = vmatpush1.msra.mxu0 0.0
      %779 = vmatprep.subr.mxu0 0.0
      %780 = vmatpush1.msra.mxu0 0.0
      %781 = vmatprep.subr.mxu0 0.0
      %782 = vmatpush1.msra.mxu0 0.0
      %783 = vmatprep.subr.mxu0 0.0
      %784 = vmatpush1.msra.mxu0 0.0
      %785 = vmatprep.mubr.f32.mxu0 0.0
      %786 = vmatmul.mubr.f32.gmra.mrb[0].mxu0 %v626
      %v787 = vpop.f32.mrb[0].mxu0
      %v788 = vadd.f32 %v592, %v787
      %v789 = vpop.f32.mrb[0].mxu0
      %790 = vmatprep.mubr.f32.mxu0 0.0
      %791 = vmatmul.mubr.f32.gmra.mrb[0].mxu0 %v629
      %v792 = vpop.f32.mrb[0].mxu0
      %v793 = vadd.f32 %v593, %v792
      %v794 = vpop.f32.mrb[0].mxu0
      %795 = vmatprep.mubr.f32.mxu0 0.0
      %796 = vmatmul.mubr.f32.gmra.mrb[0].mxu0 %v632
      %v797 = vpop.f32.mrb[0].mxu0
      %v798 = vadd.f32 %v594, %v797
      %v799 = vpop.f32.mrb[0].mxu0
      %800 = vmatprep.mubr.f32.mxu0 0.0
      %801 = vmatmul.mubr.f32.gmra.mrb[0].mxu0 %v635
      %v802 = vpop.f32.mrb[0].mxu0
      %v803 = vadd.f32 %v595, %v802
      %v804 = vpop.f32.mrb[0].mxu0
      %805 = vmatprep.mubr.f32.mxu0 0.0
      %806 = vmatmul.mubr.f32.gmra.mrb[0].mxu0 %v638
      %v807 = vpop.f32.mrb[0].mxu0
      %v808 = vadd.f32 %v596, %v807
      %v809 = vpop.f32.mrb[0].mxu0
      %810 = vmatprep.mubr.f32.mxu0 0.0
      %811 = vmatmul.mubr.f32.gmra.mrb[0].mxu0 %v641
      %v812 = vpop.f32.mrb[0].mxu0
      %v813 = vadd.f32 %v597, %v812
      %v814 = vpop.f32.mrb[0].mxu0
      %815 = vmatprep.mubr.f32.mxu0 0.0
      %816 = vmatmul.mubr.f32.gmra.mrb[0].mxu0 %v644
      %v817 = vpop.f32.mrb[0].mxu0
      %v818 = vadd.f32 %v598, %v817
      %v819 = vpop.f32.mrb[0].mxu0
      %820 = vmatprep.mubr.f32.mxu0 0.0
      %821 = vmatmul.mubr.f32.gmra.mrb[0].mxu0 %v647
      %v822 = vpop.f32.mrb[0].mxu0
      %v823 = vadd.f32 %v599, %v822
      %v824 = vpop.f32.mrb[0].mxu0
      %825 = vmatprep.mubr.f32.mxu0 0.0
      %826 = vmatmul.mubr.f32.gmra.mrb[0].mxu0 %v650
      %v827 = vpop.f32.mrb[0].mxu0
      %v828 = vadd.f32 %v600, %v827
      %v829 = vpop.f32.mrb[0].mxu0
      %830 = vmatprep.mubr.f32.mxu0 0.0
      %831 = vmatmul.mubr.f32.gmra.mrb[0].mxu0 %v653
      %v832 = vpop.f32.mrb[0].mxu0
      %v833 = vadd.f32 %v601, %v832
      %v834 = vpop.f32.mrb[0].mxu0
      %835 = vmatprep.mubr.f32.mxu0 0.0
      %836 = vmatmul.mubr.f32.gmra.mrb[0].mxu0 %v656
      %v837 = vpop.f32.mrb[0].mxu0
      %v838 = vadd.f32 %v602, %v837
      %v839 = vpop.f32.mrb[0].mxu0
      %840 = vmatprep.mubr.f32.mxu0 0.0
      %841 = vmatmul.mubr.f32.gmra.mrb[0].mxu0 %v659
      %v842 = vpop.f32.mrb[0].mxu0
      %v843 = vadd.f32 %v603, %v842
      %v844 = vpop.f32.mrb[0].mxu0
      %845 = vmatprep.mubr.f32.mxu0 0.0
      %846 = vmatmul.mubr.f32.gmra.mrb[0].mxu0 %v662
      %v847 = vpop.f32.mrb[0].mxu0
      %v848 = vadd.f32 %v604, %v847
      %v849 = vpop.f32.mrb[0].mxu0
      %850 = vmatprep.mubr.f32.mxu0 0.0
      %851 = vmatmul.mubr.f32.gmra.mrb[0].mxu0 %v665
      %v852 = vpop.f32.mrb[0].mxu0
      %v853 = vadd.f32 %v605, %v852
      %v854 = vpop.f32.mrb[0].mxu0
      %855 = vmatprep.mubr.f32.mxu0 0.0
      %856 = vmatmul.mubr.f32.gmra.mrb[0].mxu0 %v668
      %v857 = vpop.f32.mrb[0].mxu0
      %v858 = vadd.f32 %v606, %v857
      %v859 = vpop.f32.mrb[0].mxu0
      %860 = vmatprep.mubr.f32.mxu0 0.0
      %861 = vmatmul.mubr.f32.gmra.mrb[0].mxu0 %v671
      %v862 = vpop.f32.mrb[0].mxu0
      %v863 = vadd.f32 %v607, %v862
      %v864 = vpop.f32.mrb[0].mxu0
      %865 = vmatprep.mubr.f32.mxu0 0.0
      %866 = vmatmul.mubr.f32.gmra.mrb[0].mxu0 %v674
      %v867 = vpop.f32.mrb[0].mxu0
      %v868 = vadd.f32 %v608, %v867
      %v869 = vpop.f32.mrb[0].mxu0
      %870 = vmatprep.mubr.f32.mxu0 0.0
      %871 = vmatmul.mubr.f32.gmra.mrb[0].mxu0 %v677
      %v872 = vpop.f32.mrb[0].mxu0
      %v873 = vadd.f32 %v609, %v872
      %v874 = vpop.f32.mrb[0].mxu0
      %875 = vmatprep.mubr.f32.mxu0 0.0
      %876 = vmatmul.mubr.f32.gmra.mrb[0].mxu0 %v680
      %v877 = vpop.f32.mrb[0].mxu0
      %v878 = vadd.f32 %v610, %v877
      %v879 = vpop.f32.mrb[0].mxu0
      %880 = vmatprep.mubr.f32.mxu0 0.0
      %881 = vmatmul.mubr.f32.gmra.mrb[0].mxu0 %v683
      %v882 = vpop.f32.mrb[0].mxu0
      %v883 = vadd.f32 %v611, %v882
      %v884 = vpop.f32.mrb[0].mxu0
      %885 = vmatprep.mubr.f32.mxu0 0.0
      %886 = vmatmul.mubr.f32.gmra.mrb[0].mxu0 %v686
      %v887 = vpop.f32.mrb[0].mxu0
      %v888 = vadd.f32 %v612, %v887
      %v889 = vpop.f32.mrb[0].mxu0
      %890 = vmatprep.mubr.f32.mxu0 0.0
      %891 = vmatmul.mubr.f32.gmra.mrb[0].mxu0 %v689
      %v892 = vpop.f32.mrb[0].mxu0
      %v893 = vadd.f32 %v613, %v892
      %v894 = vpop.f32.mrb[0].mxu0
      %895 = vmatprep.mubr.f32.mxu0 0.0
      %896 = vmatmul.mubr.f32.gmra.mrb[0].mxu0 %v692
      %v897 = vpop.f32.mrb[0].mxu0
      %v898 = vadd.f32 %v614, %v897
      %v899 = vpop.f32.mrb[0].mxu0
      %900 = vmatprep.mubr.f32.mxu0 0.0
      %901 = vmatmul.mubr.f32.gmra.mrb[0].mxu0 %v695
      %v902 = vpop.f32.mrb[0].mxu0
      %v903 = vadd.f32 %v615, %v902
      %v904 = vpop.f32.mrb[0].mxu0
      %905 = vmatprep.mubr.f32.mxu0 0.0
      %906 = vmatmul.mubr.f32.gmra.mrb[0].mxu0 %v698
      %v907 = vpop.f32.mrb[0].mxu0
      %v908 = vadd.f32 %v616, %v907
      %v909 = vpop.f32.mrb[0].mxu0
      %910 = vmatprep.mubr.f32.mxu0 0.0
      %911 = vmatmul.mubr.f32.gmra.mrb[0].mxu0 %v701
      %v912 = vpop.f32.mrb[0].mxu0
      %v913 = vadd.f32 %v617, %v912
      %v914 = vpop.f32.mrb[0].mxu0
      %915 = vmatprep.mubr.f32.mxu0 0.0
      %916 = vmatmul.mubr.f32.gmra.mrb[0].mxu0 %v704
      %v917 = vpop.f32.mrb[0].mxu0
      %v918 = vadd.f32 %v618, %v917
      %v919 = vpop.f32.mrb[0].mxu0
      %920 = vmatprep.mubr.f32.mxu0 0.0
      %921 = vmatmul.mubr.f32.gmra.mrb[0].mxu0 %v707
      %v922 = vpop.f32.mrb[0].mxu0
      %v923 = vadd.f32 %v619, %v922
      %v924 = vpop.f32.mrb[0].mxu0
      %925 = vmatprep.mubr.f32.mxu0 0.0
      %926 = vmatmul.mubr.f32.gmra.mrb[0].mxu0 %v710
      %v927 = vpop.f32.mrb[0].mxu0
      %v928 = vadd.f32 %v620, %v927
      %v929 = vpop.f32.mrb[0].mxu0
      %930 = vmatprep.mubr.f32.mxu0 0.0
      %931 = vmatmul.mubr.f32.gmra.mrb[0].mxu0 %v713
      %v932 = vpop.f32.mrb[0].mxu0
      %v933 = vadd.f32 %v621, %v932
      %v934 = vpop.f32.mrb[0].mxu0
      %935 = vmatprep.mubr.f32.mxu0 0.0
      %936 = vmatmul.mubr.f32.gmra.mrb[0].mxu0 %v716
      %v937 = vpop.f32.mrb[0].mxu0
      %v938 = vadd.f32 %v622, %v937
      %v939 = vpop.f32.mrb[0].mxu0
      %940 = vmatprep.mubr.f32.mxu0 0.0
      %941 = vmatmul.mubr.f32.gmra.mrb[0].mxu0 %v719
      %v942 = vpop.f32.mrb[0].mxu0
      %v943 = vadd.f32 %v623, %v942
      %v944 = vpop.f32.mrb[0].mxu0
      %945 = vdwg.mxu0
      %vm946 = vcmask 64512
      %v947 = vsel %vm946, %v788, -inf
      %v948 = vsel %vm946, %v793, -inf
      %v949 = vsel %vm946, %v798, -inf
      %v950 = vsel %vm946, %v803, -inf
      %v951 = vsel %vm946, %v808, -inf
      %v952 = vmax.f32 %v947, %v951
      %v953 = vsel %vm946, %v813, -inf
      %v954 = vmax.f32 %v948, %v953
      %v955 = vsel %vm946, %v818, -inf
      %v956 = vmax.f32 %v949, %v955
      %v957 = vsel %vm946, %v823, -inf
      %v958 = vmax.f32 %v950, %v957
      %v959 = vsel %vm946, %v828, -inf
      %v960 = vmax.f32 %v952, %v959
      %v961 = vsel %vm946, %v833, -inf
      %v962 = vmax.f32 %v954, %v961
      %v963 = vsel %vm946, %v838, -inf
      %v964 = vmax.f32 %v956, %v963
      %v965 = vsel %vm946, %v843, -inf
      %v966 = vmax.f32 %v958, %v965
      %v967 = vsel %vm946, %v848, -inf
      %v968 = vmax.f32 %v960, %v967
      %v969 = vsel %vm946, %v853, -inf
      %v970 = vmax.f32 %v962, %v969
      %v971 = vsel %vm946, %v858, -inf
      %v972 = vmax.f32 %v964, %v971
      %v973 = vsel %vm946, %v863, -inf
      %v974 = vmax.f32 %v966, %v973
      %v975 = vsel %vm946, %v868, -inf
      %v976 = vmax.f32 %v968, %v975
      %v977 = vsel %vm946, %v873, -inf
      %v978 = vmax.f32 %v970, %v977
      %v979 = vsel %vm946, %v878, -inf
      %v980 = vmax.f32 %v972, %v979
      %v981 = vsel %vm946, %v883, -inf
      %v982 = vmax.f32 %v974, %v981
      %v983 = vsel %vm946, %v888, -inf
      %v984 = vmax.f32 %v976, %v983
      %v985 = vsel %vm946, %v893, -inf
      %v986 = vmax.f32 %v978, %v985
      %v987 = vsel %vm946, %v898, -inf
      %v988 = vmax.f32 %v980, %v987
      %v989 = vsel %vm946, %v903, -inf
      %v990 = vmax.f32 %v982, %v989
      %v991 = vsel %vm946, %v908, -inf
      %v992 = vmax.f32 %v984, %v991
      %v993 = vsel %vm946, %v913, -inf
      %v994 = vmax.f32 %v986, %v993
      %v995 = vsel %vm946, %v918, -inf
      %v996 = vmax.f32 %v988, %v995
      %v997 = vsel %vm946, %v923, -inf
      %v998 = vmax.f32 %v990, %v997
      %v999 = vsel %vm946, %v928, -inf
      %v1000 = vmax.f32 %v992, %v999
      %v1001 = vsel %vm946, %v933, -inf
      %v1002 = vmax.f32 %v994, %v1001
      %v1003 = vsel %vm946, %v938, -inf
      %v1004 = vmax.f32 %v996, %v1003
      %v1005 = vsel %vm946, %v943, -inf
      %v1006 = vmax.f32 %v998, %v1005
      %v1007 = vmax.f32 %v1000, %v1002
      %v1008 = vmax.f32 %v1004, %v1006
      %v1009 = vmax.f32 %v1007, %v1008
      %v1010 = vrot.slane %v1009, 4
      %v1011 = vmax.f32 %v1009, %v1010
      %v1012 = vrot.slane %v1011, 2
      %v1013 = vmax.f32 %v1011, %v1012
      %v1014 = vrot.slane %v1013, 1
      %v1015 = vmax.f32 %v1013, %v1014
      %v1016 = vld [vmem:[#allocation2] sm:$0x1]
      %v1017 = vmax.f32 %v1016, %v1015
      %v1018 = vsub.f32 %v1016, %v1017
      %v1019 = vmul.f32 %v1018, 1.442695
      %v1020 = vpow.pop %v1019
      %vm1021 = vcmask 57344
      %1022 = vst.msk [vmem:[#allocation2] sm:$0x1] %vm1021, %v1017
      %v1024 = vlaneseq
      %v1025 = vshrl.u32 %v1024, 7
      %v1026 = vsub.s32 0, %v1025
      %v1027 = vrot.slane %v1017, %v1026
      %v1029 = vsub.f32 %v788, %v1027
      %v1030 = vsub.f32 %v793, %v1027
      %v1031 = vsub.f32 %v798, %v1027
      %v1032 = vsub.f32 %v803, %v1027
      %v1033 = vsub.f32 %v808, %v1027
      %v1034 = vsub.f32 %v813, %v1027
      %v1035 = vsub.f32 %v818, %v1027
      %v1036 = vsub.f32 %v823, %v1027
      %v1037 = vsub.f32 %v828, %v1027
      %v1038 = vsub.f32 %v833, %v1027
      %v1039 = vsub.f32 %v838, %v1027
      %v1040 = vsub.f32 %v843, %v1027
      %v1041 = vsub.f32 %v848, %v1027
      %v1042 = vsub.f32 %v853, %v1027
      %v1043 = vsub.f32 %v858, %v1027
      %v1044 = vsub.f32 %v863, %v1027
      %v1045 = vsub.f32 %v868, %v1027
      %v1046 = vsub.f32 %v873, %v1027
      %v1047 = vsub.f32 %v878, %v1027
      %v1048 = vsub.f32 %v883, %v1027
      %v1049 = vsub.f32 %v888, %v1027
      %v1050 = vsub.f32 %v893, %v1027
      %v1051 = vsub.f32 %v898, %v1027
      %v1052 = vsub.f32 %v903, %v1027
      %v1053 = vsub.f32 %v908, %v1027
      %v1054 = vsub.f32 %v913, %v1027
      %v1055 = vsub.f32 %v918, %v1027
      %v1056 = vsub.f32 %v923, %v1027
      %v1057 = vsub.f32 %v928, %v1027
      %v1058 = vsub.f32 %v933, %v1027
      %v1059 = vsub.f32 %v938, %v1027
      %v1060 = vsub.f32 %v943, %v1027
      %v1061 = vmul.f32 %v1029, 1.442695
      %v1062 = vpow.pop %v1061
      %v1063 = vmul.f32 %v1030, 1.442695
      %v1064 = vpow.pop %v1063
      %v1065 = vmul.f32 %v1031, 1.442695
      %v1066 = vpow.pop %v1065
      %v1067 = vmul.f32 %v1032, 1.442695
      %v1068 = vpow.pop %v1067
      %v1069 = vmul.f32 %v1033, 1.442695
      %v1070 = vpow.pop %v1069
      %v1071 = vmul.f32 %v1034, 1.442695
      %v1072 = vpow.pop %v1071
      %v1073 = vmul.f32 %v1035, 1.442695
      %v1074 = vpow.pop %v1073
      %v1075 = vmul.f32 %v1036, 1.442695
      %v1076 = vpow.pop %v1075
      %v1077 = vmul.f32 %v1037, 1.442695
      %v1078 = vpow.pop %v1077
      %v1079 = vmul.f32 %v1038, 1.442695
      %v1080 = vpow.pop %v1079
      %v1081 = vmul.f32 %v1039, 1.442695
      %v1082 = vpow.pop %v1081
      %v1083 = vmul.f32 %v1040, 1.442695
      %v1084 = vpow.pop %v1083
      %v1085 = vmul.f32 %v1041, 1.442695
      %v1086 = vpow.pop %v1085
      %v1087 = vmul.f32 %v1042, 1.442695
      %v1088 = vpow.pop %v1087
      %v1089 = vmul.f32 %v1043, 1.442695
      %v1090 = vpow.pop %v1089
      %v1091 = vmul.f32 %v1044, 1.442695
      %v1092 = vpow.pop %v1091
      %v1093 = vmul.f32 %v1045, 1.442695
      %v1094 = vpow.pop %v1093
      %v1095 = vmul.f32 %v1046, 1.442695
      %v1096 = vpow.pop %v1095
      %v1097 = vmul.f32 %v1047, 1.442695
      %v1098 = vpow.pop %v1097
      %v1099 = vmul.f32 %v1048, 1.442695
      %v1100 = vpow.pop %v1099
      %v1101 = vmul.f32 %v1049, 1.442695
      %v1102 = vpow.pop %v1101
      %v1103 = vmul.f32 %v1050, 1.442695
      %v1104 = vpow.pop %v1103
      %v1105 = vmul.f32 %v1051, 1.442695
      %v1106 = vpow.pop %v1105
      %v1107 = vmul.f32 %v1052, 1.442695
      %v1108 = vpow.pop %v1107
      %v1109 = vmul.f32 %v1053, 1.442695
      %v1110 = vpow.pop %v1109
      %v1111 = vmul.f32 %v1054, 1.442695
      %v1112 = vpow.pop %v1111
      %v1113 = vmul.f32 %v1055, 1.442695
      %v1114 = vpow.pop %v1113
      %v1115 = vmul.f32 %v1056, 1.442695
      %v1116 = vpow.pop %v1115
      %v1117 = vmul.f32 %v1057, 1.442695
      %v1118 = vpow.pop %v1117
      %v1119 = vmul.f32 %v1058, 1.442695
      %v1120 = vpow.pop %v1119
      %v1121 = vmul.f32 %v1059, 1.442695
      %v1122 = vpow.pop %v1121
      %v1123 = vmul.f32 %v1060, 1.442695
      %v1124 = vpow.pop %v1123
      %v1125 = vpack.c.bf16 %v1064, %v1062
      %v1126 = vpack.c.bf16 %v1068, %v1066
      %v1127 = vpack.c.bf16 %v1072, %v1070
      %v1128 = vpack.c.bf16 %v1076, %v1074
      %v1129 = vpack.c.bf16 %v1080, %v1078
      %v1130 = vpack.c.bf16 %v1084, %v1082
      %v1131 = vpack.c.bf16 %v1088, %v1086
      %v1132 = vpack.c.bf16 %v1092, %v1090
      %v1133 = vpack.c.bf16 %v1096, %v1094
      %v1134 = vpack.c.bf16 %v1100, %v1098
      %v1135 = vpack.c.bf16 %v1104, %v1102
      %v1136 = vpack.c.bf16 %v1108, %v1106
      %v1137 = vpack.c.bf16 %v1112, %v1110
      %v1138 = vpack.c.bf16 %v1116, %v1114
      %v1139 = vpack.c.bf16 %v1120, %v1118
      %v1140 = vpack.c.bf16 %v1124, %v1122
      %s1141 = smul.u32 %s22, 32
      %v1142 = vlaneseq
      %v1143 = vshrl.u32 %v1142, 7
      %v1144 = vadd.s32 %v1143, 8
      %v1145 = vadd.s32 %v1143, 16
      %v1146 = vadd.s32 %v1143, 24
      %v1147 = vld [vmem:[%s371] sm:$0x3]
      %v1148 = vstv %s1141
      %v1149 = vsub.s32 %v1147, %v1148
      %v1150 = vlaneseq
      %v1151 = vshrl.u32 %v1150, 7
      %v1152 = vsub.s32 0, %v1151
      %v1153 = vrot.slane %v1149, %v1152
      %v1154 = vlaneseq
      %v1155 = vshrl.u32 %v1154, 7
      %v1156 = vsub.s32 1, %v1155
      %v1157 = vrot.slane %v1149, %v1156
      %vm1158 = vcmp.eq.s32.totalorder %v1143, %v1153
      %vm1159 = vcmp.eq.s32.totalorder %v1143, %v1157
      %vm1160 = vcmp.eq.s32.totalorder %v1144, %v1153
      %vm1161 = vcmp.eq.s32.totalorder %v1144, %v1157
      %vm1162 = vcmp.eq.s32.totalorder %v1145, %v1153
      %vm1163 = vcmp.eq.s32.totalorder %v1145, %v1157
      %vm1164 = vcmp.eq.s32.totalorder %v1146, %v1153
      %vm1165 = vcmp.eq.s32.totalorder %v1146, %v1157
      %v1166 = vsel %vm1158, 1, 0
      %v1167 = vsel %vm1159, 1, 0
      %v1168 = vsel %vm1160, 1, 0
      %v1169 = vsel %vm1161, 1, 0
      %v1170 = vsel %vm1162, 1, 0
      %v1171 = vsel %vm1163, 1, 0
      %v1172 = vsel %vm1164, 1, 0
      %v1173 = vsel %vm1165, 1, 0
      %v1174 = vcvt.s32.f32 %v1166
      %v1175 = vcvt.s32.f32 %v1167
      %v1176 = vcvt.s32.f32 %v1168
      %v1177 = vcvt.s32.f32 %v1169
      %v1178 = vcvt.s32.f32 %v1170
      %v1179 = vcvt.s32.f32 %v1171
      %v1180 = vcvt.s32.f32 %v1172
      %v1181 = vcvt.s32.f32 %v1173
      %v1182 = vpack.c.bf16 %v1176, %v1174
      %v1183 = vpack.c.bf16 %v1177, %v1175
      %v1184 = vpack.c.bf16 %v1180, %v1178
      %v1185 = vpack.c.bf16 %v1181, %v1179
      %1186 = vmatprep.subr.bf16.mxu0 0
      %1187 = vmatpush1.bf16.msra.mxu0 %v1125
      %1188 = vmatprep.subr.bf16.mxu0 0
      %1189 = vmatpush1.bf16.msra.mxu0 %v1126
      %1190 = vmatprep.subr.bf16.mxu0 0
      %1191 = vmatpush1.bf16.msra.mxu0 %v1127
      %1192 = vmatprep.subr.bf16.mxu0 0
      %1193 = vmatpush1.bf16.msra.mxu0 %v1128
      %1194 = vmatprep.subr.bf16.mxu0 0
      %1195 = vmatpush1.bf16.msra.mxu0 %v1129
      %1196 = vmatprep.subr.bf16.mxu0 0
      %1197 = vmatpush1.bf16.msra.mxu0 %v1130
      %1198 = vmatprep.subr.bf16.mxu0 0
      %1199 = vmatpush1.bf16.msra.mxu0 %v1131
      %1200 = vmatprep.subr.bf16.mxu0 0
      %1201 = vmatpush1.bf16.msra.mxu0 %v1132
      %1202 = vmatprep.subr.bf16.mxu0 0
      %1203 = vmatpush1.bf16.msra.mxu0 %v1133
      %1204 = vmatprep.subr.bf16.mxu0 0
      %1205 = vmatpush1.bf16.msra.mxu0 %v1134
      %1206 = vmatprep.subr.bf16.mxu0 0
      %1207 = vmatpush1.bf16.msra.mxu0 %v1135
      %1208 = vmatprep.subr.bf16.mxu0 0
      %1209 = vmatpush1.bf16.msra.mxu0 %v1136
      %1210 = vmatprep.subr.bf16.mxu0 0
      %1211 = vmatpush1.bf16.msra.mxu0 %v1137
      %1212 = vmatprep.subr.bf16.mxu0 0
      %1213 = vmatpush1.bf16.msra.mxu0 %v1138
      %1214 = vmatprep.subr.bf16.mxu0 0
      %1215 = vmatpush1.bf16.msra.mxu0 %v1139
      %1216 = vmatprep.subr.bf16.mxu0 0
      %1217 = vmatpush1.bf16.msra.mxu0 %v1140
      %1218 = vmatprep.mubr.bf16.mxu0 %v1183
      %1219 = vmatmul.mubr.bf16.gmra.mrb[0].mxu0 %v1182
      %v1220 = vpop.f32.mrb[0].mxu0
      %v1221 = vadd.f32 0.0, %v1220
      %v1222 = vpop.f32.mrb[0].mxu0
      %v1223 = vpop.f32.mrb[0].mxu0
      %v1224 = vadd.f32 0.0, %v1223
      %v1225 = vpop.f32.mrb[0].mxu0
      %1226 = vmatprep.mubr.bf16.mxu0 %v1185
      %1227 = vmatmul.mubr.bf16.gmra.mrb[0].mxu0 %v1184
      %v1228 = vpop.f32.mrb[0].mxu0
      %v1229 = vadd.f32 0.0, %v1228
      %v1230 = vpop.f32.mrb[0].mxu0
      %v1231 = vpop.f32.mrb[0].mxu0
      %v1232 = vadd.f32 0.0, %v1231
      %v1233 = vpop.f32.mrb[0].mxu0
      %1234 = vdwg.mxu0
      %v1235 = vld [vmem:[#allocation3] sm:$0xff]
      %v1236 = vld [vmem:[#allocation3 + $0x8] sm:$0xff]
      %v1237 = vld [vmem:[#allocation3 + $0x10] sm:$0xff]
      %v1238 = vld [vmem:[#allocation3 + $0x18] sm:$0xff]
      %v1240 = vlaneseq
      %v1241 = vshrl.u32 %v1240, 7
      %v1242 = vsub.s32 0, %v1241
      %v1243 = vrot.slane %v1020, %v1242
      %v1245 = vmul.f32 %v1235, %v1243
      %v1246 = vmul.f32 %v1236, %v1243
      %v1247 = vmul.f32 %v1237, %v1243
      %v1248 = vmul.f32 %v1238, %v1243
      %v1249 = vadd.f32 %v1245, %v1221
      %v1250 = vadd.f32 %v1246, %v1224
      %v1251 = vadd.f32 %v1247, %v1229
      %v1252 = vadd.f32 %v1248, %v1232
      %1253 = vst.msk [vmem:[#allocation3] sm:$0xff] %vm946, %v1249
      %1254 = vst.msk [vmem:[#allocation3 + $0x8] sm:$0xff] %vm946, %v1250
      %1255 = vst.msk [vmem:[#allocation3 + $0x10] sm:$0xff] %vm946, %v1251
      %1256 = vst.msk [vmem:[#allocation3 + $0x18] sm:$0xff] %vm946, %v1252
      %v1257 = vld [vmem:[%s6] sm:$0xff]
      %v1259 = vsel %vm946, %v1062, 0
      %v1262 = vsel %vm946, %v1064, 0
      %v1265 = vsel %vm946, %v1066, 0
      %v1268 = vsel %vm946, %v1068, 0
      %v1271 = vsel %vm946, %v1070, 0
      %v1274 = vsel %vm946, %v1072, 0
      %v1277 = vsel %vm946, %v1074, 0
      %v1280 = vsel %vm946, %v1076, 0
      %v1283 = vsel %vm946, %v1078, 0
      %v1286 = vsel %vm946, %v1080, 0
      %v1289 = vsel %vm946, %v1082, 0
      %v1292 = vsel %vm946, %v1084, 0
      %v1295 = vsel %vm946, %v1086, 0
      %v1298 = vsel %vm946, %v1088, 0
      %v1301 = vsel %vm946, %v1090, 0
      %v1304 = vsel %vm946, %v1092, 0
      %v1307 = vsel %vm946, %v1094, 0
      %v1310 = vsel %vm946, %v1096, 0
      %v1313 = vsel %vm946, %v1098, 0
      %v1316 = vsel %vm946, %v1100, 0
      %v1319 = vsel %vm946, %v1102, 0
      %v1322 = vsel %vm946, %v1104, 0
      %v1325 = vsel %vm946, %v1106, 0
      %v1328 = vsel %vm946, %v1108, 0
      %v1331 = vsel %vm946, %v1110, 0
      %v1334 = vsel %vm946, %v1112, 0
      %v1337 = vsel %vm946, %v1114, 0
      %v1340 = vsel %vm946, %v1116, 0
      %v1343 = vsel %vm946, %v1118, 0
      %v1346 = vsel %vm946, %v1120, 0
      %v1349 = vsel %vm946, %v1122, 0
      %v1352 = vsel %vm946, %v1124, 0
      %1354 = vmatprep.subr.mxu0 0.0
      %1355 = vmatpush1.msra.mxu0 %v1257
      %1356 = vmatprep.subr.mxu0 0.0
      %1357 = vmatpush1.msra.mxu0 0.0
      %1358 = vmatprep.subr.mxu0 0.0
      %1359 = vmatpush1.msra.mxu0 0.0
      %1360 = vmatprep.subr.mxu0 0.0
      %1361 = vmatpush1.msra.mxu0 0.0
      %1362 = vmatprep.subr.mxu0 0.0
      %1363 = vmatpush1.msra.mxu0 0.0
      %1364 = vmatprep.subr.mxu0 0.0
      %1365 = vmatpush1.msra.mxu0 0.0
      %1366 = vmatprep.subr.mxu0 0.0
      %1367 = vmatpush1.msra.mxu0 0.0
      %1368 = vmatprep.subr.mxu0 0.0
      %1369 = vmatpush1.msra.mxu0 0.0
      %1370 = vmatprep.subr.mxu0 0.0
      %1371 = vmatpush1.msra.mxu0 0.0
      %1372 = vmatprep.subr.mxu0 0.0
      %1373 = vmatpush1.msra.mxu0 0.0
      %1374 = vmatprep.subr.mxu0 0.0
      %1375 = vmatpush1.msra.mxu0 0.0
      %1376 = vmatprep.subr.mxu0 0.0
      %1377 = vmatpush1.msra.mxu0 0.0
      %1378 = vmatprep.subr.mxu0 0.0
      %1379 = vmatpush1.msra.mxu0 0.0
      %1380 = vmatprep.subr.mxu0 0.0
      %1381 = vmatpush1.msra.mxu0 0.0
      %1382 = vmatprep.subr.mxu0 0.0
      %1383 = vmatpush1.msra.mxu0 0.0
      %1384 = vmatprep.subr.mxu0 0.0
      %1385 = vmatpush1.msra.mxu0 0.0
      %1386 = vmatprep.subr.mxu0 0.0
      %1387 = vmatpush1.msra.mxu0 0.0
      %1388 = vmatprep.subr.mxu0 0.0
      %1389 = vmatpush1.msra.mxu0 0.0
      %1390 = vmatprep.subr.mxu0 0.0
      %1391 = vmatpush1.msra.mxu0 0.0
      %1392 = vmatprep.subr.mxu0 0.0
      %1393 = vmatpush1.msra.mxu0 0.0
      %1394 = vmatprep.subr.mxu0 0.0
      %1395 = vmatpush1.msra.mxu0 0.0
      %1396 = vmatprep.subr.mxu0 0.0
      %1397 = vmatpush1.msra.mxu0 0.0
      %1398 = vmatprep.subr.mxu0 0.0
      %1399 = vmatpush1.msra.mxu0 0.0
      %1400 = vmatprep.subr.mxu0 0.0
      %1401 = vmatpush1.msra.mxu0 0.0
      %1402 = vmatprep.subr.mxu0 0.0
      %1403 = vmatpush1.msra.mxu0 0.0
      %1404 = vmatprep.subr.mxu0 0.0
      %1405 = vmatpush1.msra.mxu0 0.0
      %1406 = vmatprep.subr.mxu0 0.0
      %1407 = vmatpush1.msra.mxu0 0.0
      %1408 = vmatprep.subr.mxu0 0.0
      %1409 = vmatpush1.msra.mxu0 0.0
      %1410 = vmatprep.subr.mxu0 0.0
      %1411 = vmatpush1.msra.mxu0 0.0
      %1412 = vmatprep.subr.mxu0 0.0
      %1413 = vmatpush1.msra.mxu0 0.0
      %1414 = vmatprep.subr.mxu0 0.0
      %1415 = vmatpush1.msra.mxu0 0.0
      %1416 = vmatprep.subr.mxu0 0.0
      %1417 = vmatpush1.msra.mxu0 0.0
      %1418 = vmatprep.mubr.f32.mxu0 0.0
      %1419 = vmatmul.mubr.f32.gmra.mrb[0].mxu0 %v1259
      %v1420 = vpop.f32.mrb[0].mxu0
      %v1421 = vadd.f32 0.0, %v1420
      %v1422 = vpop.f32.mrb[0].mxu0
      %1423 = vmatprep.mubr.f32.mxu0 0.0
      %1424 = vmatmul.mubr.f32.gmra.mrb[0].mxu0 %v1262
      %v1425 = vpop.f32.mrb[0].mxu0
      %v1426 = vadd.f32 0.0, %v1425
      %v1427 = vpop.f32.mrb[0].mxu0
      %1428 = vmatprep.mubr.f32.mxu0 0.0
      %1429 = vmatmul.mubr.f32.gmra.mrb[0].mxu0 %v1265
      %v1430 = vpop.f32.mrb[0].mxu0
      %v1431 = vadd.f32 0.0, %v1430
      %v1432 = vpop.f32.mrb[0].mxu0
      %1433 = vmatprep.mubr.f32.mxu0 0.0
      %1434 = vmatmul.mubr.f32.gmra.mrb[0].mxu0 %v1268
      %v1435 = vpop.f32.mrb[0].mxu0
      %v1436 = vadd.f32 0.0, %v1435
      %v1437 = vpop.f32.mrb[0].mxu0
      %1438 = vmatprep.mubr.f32.mxu0 0.0
      %1439 = vmatmul.mubr.f32.gmra.mrb[0].mxu0 %v1271
      %v1440 = vpop.f32.mrb[0].mxu0
      %v1441 = vadd.f32 0.0, %v1440
      %v1442 = vpop.f32.mrb[0].mxu0
      %1443 = vmatprep.mubr.f32.mxu0 0.0
      %1444 = vmatmul.mubr.f32.gmra.mrb[0].mxu0 %v1274
      %v1445 = vpop.f32.mrb[0].mxu0
      %v1446 = vadd.f32 0.0, %v1445
      %v1447 = vpop.f32.mrb[0].mxu0
      %1448 = vmatprep.mubr.f32.mxu0 0.0
      %1449 = vmatmul.mubr.f32.gmra.mrb[0].mxu0 %v1277
      %v1450 = vpop.f32.mrb[0].mxu0
      %v1451 = vadd.f32 0.0, %v1450
      %v1452 = vpop.f32.mrb[0].mxu0
      %1453 = vmatprep.mubr.f32.mxu0 0.0
      %1454 = vmatmul.mubr.f32.gmra.mrb[0].mxu0 %v1280
      %v1455 = vpop.f32.mrb[0].mxu0
      %v1456 = vadd.f32 0.0, %v1455
      %v1457 = vpop.f32.mrb[0].mxu0
      %1458 = vmatprep.mubr.f32.mxu0 0.0
      %1459 = vmatmul.mubr.f32.gmra.mrb[0].mxu0 %v1283
      %v1460 = vpop.f32.mrb[0].mxu0
      %v1461 = vadd.f32 0.0, %v1460
      %v1462 = vpop.f32.mrb[0].mxu0
      %1463 = vmatprep.mubr.f32.mxu0 0.0
      %1464 = vmatmul.mubr.f32.gmra.mrb[0].mxu0 %v1286
      %v1465 = vpop.f32.mrb[0].mxu0
      %v1466 = vadd.f32 0.0, %v1465
      %v1467 = vpop.f32.mrb[0].mxu0
      %1468 = vmatprep.mubr.f32.mxu0 0.0
      %1469 = vmatmul.mubr.f32.gmra.mrb[0].mxu0 %v1289
      %v1470 = vpop.f32.mrb[0].mxu0
      %v1471 = vadd.f32 0.0, %v1470
      %v1472 = vpop.f32.mrb[0].mxu0
      %1473 = vmatprep.mubr.f32.mxu0 0.0
      %1474 = vmatmul.mubr.f32.gmra.mrb[0].mxu0 %v1292
      %v1475 = vpop.f32.mrb[0].mxu0
      %v1476 = vadd.f32 0.0, %v1475
      %v1477 = vpop.f32.mrb[0].mxu0
      %1478 = vmatprep.mubr.f32.mxu0 0.0
      %1479 = vmatmul.mubr.f32.gmra.mrb[0].mxu0 %v1295
      %v1480 = vpop.f32.mrb[0].mxu0
      %v1481 = vadd.f32 0.0, %v1480
      %v1482 = vpop.f32.mrb[0].mxu0
      %1483 = vmatprep.mubr.f32.mxu0 0.0
      %1484 = vmatmul.mubr.f32.gmra.mrb[0].mxu0 %v1298
      %v1485 = vpop.f32.mrb[0].mxu0
      %v1486 = vadd.f32 0.0, %v1485
      %v1487 = vpop.f32.mrb[0].mxu0
      %1488 = vmatprep.mubr.f32.mxu0 0.0
      %1489 = vmatmul.mubr.f32.gmra.mrb[0].mxu0 %v1301
      %v1490 = vpop.f32.mrb[0].mxu0
      %v1491 = vadd.f32 0.0, %v1490
      %v1492 = vpop.f32.mrb[0].mxu0
      %1493 = vmatprep.mubr.f32.mxu0 0.0
      %1494 = vmatmul.mubr.f32.gmra.mrb[0].mxu0 %v1304
      %v1495 = vpop.f32.mrb[0].mxu0
      %v1496 = vadd.f32 0.0, %v1495
      %v1497 = vpop.f32.mrb[0].mxu0
      %1498 = vmatprep.mubr.f32.mxu0 0.0
      %1499 = vmatmul.mubr.f32.gmra.mrb[0].mxu0 %v1307
      %v1500 = vpop.f32.mrb[0].mxu0
      %v1501 = vadd.f32 0.0, %v1500
      %v1502 = vpop.f32.mrb[0].mxu0
      %1503 = vmatprep.mubr.f32.mxu0 0.0
      %1504 = vmatmul.mubr.f32.gmra.mrb[0].mxu0 %v1310
      %v1505 = vpop.f32.mrb[0].mxu0
      %v1506 = vadd.f32 0.0, %v1505
      %v1507 = vpop.f32.mrb[0].mxu0
      %1508 = vmatprep.mubr.f32.mxu0 0.0
      %1509 = vmatmul.mubr.f32.gmra.mrb[0].mxu0 %v1313
      %v1510 = vpop.f32.mrb[0].mxu0
      %v1511 = vadd.f32 0.0, %v1510
      %v1512 = vpop.f32.mrb[0].mxu0
      %1513 = vmatprep.mubr.f32.mxu0 0.0
      %1514 = vmatmul.mubr.f32.gmra.mrb[0].mxu0 %v1316
      %v1515 = vpop.f32.mrb[0].mxu0
      %v1516 = vadd.f32 0.0, %v1515
      %v1517 = vpop.f32.mrb[0].mxu0
      %1518 = vmatprep.mubr.f32.mxu0 0.0
      %1519 = vmatmul.mubr.f32.gmra.mrb[0].mxu0 %v1319
      %v1520 = vpop.f32.mrb[0].mxu0
      %v1521 = vadd.f32 0.0, %v1520
      %v1522 = vpop.f32.mrb[0].mxu0
      %1523 = vmatprep.mubr.f32.mxu0 0.0
      %1524 = vmatmul.mubr.f32.gmra.mrb[0].mxu0 %v1322
      %v1525 = vpop.f32.mrb[0].mxu0
      %v1526 = vadd.f32 0.0, %v1525
      %v1527 = vpop.f32.mrb[0].mxu0
      %1528 = vmatprep.mubr.f32.mxu0 0.0
      %1529 = vmatmul.mubr.f32.gmra.mrb[0].mxu0 %v1325
      %v1530 = vpop.f32.mrb[0].mxu0
      %v1531 = vadd.f32 0.0, %v1530
      %v1532 = vpop.f32.mrb[0].mxu0
      %1533 = vmatprep.mubr.f32.mxu0 0.0
      %1534 = vmatmul.mubr.f32.gmra.mrb[0].mxu0 %v1328
      %v1535 = vpop.f32.mrb[0].mxu0
      %v1536 = vadd.f32 0.0, %v1535
      %v1537 = vpop.f32.mrb[0].mxu0
      %1538 = vmatprep.mubr.f32.mxu0 0.0
      %1539 = vmatmul.mubr.f32.gmra.mrb[0].mxu0 %v1331
      %v1540 = vpop.f32.mrb[0].mxu0
      %v1541 = vadd.f32 0.0, %v1540
      %v1542 = vpop.f32.mrb[0].mxu0
      %1543 = vmatprep.mubr.f32.mxu0 0.0
      %1544 = vmatmul.mubr.f32.gmra.mrb[0].mxu0 %v1334
      %v1545 = vpop.f32.mrb[0].mxu0
      %v1546 = vadd.f32 0.0, %v1545
      %v1547 = vpop.f32.mrb[0].mxu0
      %1548 = vmatprep.mubr.f32.mxu0 0.0
      %1549 = vmatmul.mubr.f32.gmra.mrb[0].mxu0 %v1337
      %v1550 = vpop.f32.mrb[0].mxu0
      %v1551 = vadd.f32 0.0, %v1550
      %v1552 = vpop.f32.mrb[0].mxu0
      %1553 = vmatprep.mubr.f32.mxu0 0.0
      %1554 = vmatmul.mubr.f32.gmra.mrb[0].mxu0 %v1340
      %v1555 = vpop.f32.mrb[0].mxu0
      %v1556 = vadd.f32 0.0, %v1555
      %v1557 = vpop.f32.mrb[0].mxu0
      %1558 = vmatprep.mubr.f32.mxu0 0.0
      %1559 = vmatmul.mubr.f32.gmra.mrb[0].mxu0 %v1343
      %v1560 = vpop.f32.mrb[0].mxu0
      %v1561 = vadd.f32 0.0, %v1560
      %v1562 = vpop.f32.mrb[0].mxu0
      %1563 = vmatprep.mubr.f32.mxu0 0.0
      %1564 = vmatmul.mubr.f32.gmra.mrb[0].mxu0 %v1346
      %v1565 = vpop.f32.mrb[0].mxu0
      %v1566 = vadd.f32 0.0, %v1565
      %v1567 = vpop.f32.mrb[0].mxu0
      %1568 = vmatprep.mubr.f32.mxu0 0.0
      %1569 = vmatmul.mubr.f32.gmra.mrb[0].mxu0 %v1349
      %v1570 = vpop.f32.mrb[0].mxu0
      %v1571 = vadd.f32 0.0, %v1570
      %v1572 = vpop.f32.mrb[0].mxu0
      %1573 = vmatprep.mubr.f32.mxu0 0.0
      %1574 = vmatmul.mubr.f32.gmra.mrb[0].mxu0 %v1352
      %v1575 = vpop.f32.mrb[0].mxu0
      %v1576 = vadd.f32 0.0, %v1575
      %v1577 = vpop.f32.mrb[0].mxu0
      %1578 = vdwg.mxu0
      %v1579 = vld [vmem:[%s360] sm:$0xff]
      %v1580 = vld [vmem:[%s360 + $0x8] sm:$0xff]
      %v1581 = vld [vmem:[%s360 + $0x10] sm:$0xff]
      %v1582 = vld [vmem:[%s360 + $0x18] sm:$0xff]
      %v1583 = vld [vmem:[%s360 + $0x20] sm:$0xff]
      %v1584 = vld [vmem:[%s360 + $0x28] sm:$0xff]
      %v1585 = vld [vmem:[%s360 + $0x30] sm:$0xff]
      %v1586 = vld [vmem:[%s360 + $0x38] sm:$0xff]
      %v1587 = vld [vmem:[%s360 + $0x40] sm:$0xff]
      %v1588 = vld [vmem:[%s360 + $0x48] sm:$0xff]
      %v1589 = vld [vmem:[%s360 + $0x50] sm:$0xff]
      %v1590 = vld [vmem:[%s360 + $0x58] sm:$0xff]
      %v1591 = vld [vmem:[%s360 + $0x60] sm:$0xff]
      %v1592 = vld [vmem:[%s360 + $0x68] sm:$0xff]
      %v1593 = vld [vmem:[%s360 + $0x70] sm:$0xff]
      %v1594 = vld [vmem:[%s360 + $0x78] sm:$0xff]
      %v1595 = vld [vmem:[%s360 + $0x80] sm:$0xff]
      %v1596 = vld [vmem:[%s360 + $0x88] sm:$0xff]
      %v1597 = vld [vmem:[%s360 + $0x90] sm:$0xff]
      %v1598 = vld [vmem:[%s360 + $0x98] sm:$0xff]
      %v1599 = vld [vmem:[%s360 + $0xa0] sm:$0xff]
      %v1600 = vld [vmem:[%s360 + $0xa8] sm:$0xff]
      %v1601 = vld [vmem:[%s360 + $0xb0] sm:$0xff]
      %v1602 = vld [vmem:[%s360 + $0xb8] sm:$0xff]
      %v1603 = vld [vmem:[%s360 + $0xc0] sm:$0xff]
      %v1604 = vld [vmem:[%s360 + $0xc8] sm:$0xff]
      %v1605 = vld [vmem:[%s360 + $0xd0] sm:$0xff]
      %v1606 = vld [vmem:[%s360 + $0xd8] sm:$0xff]
      %v1607 = vld [vmem:[%s360 + $0xe0] sm:$0xff]
      %v1608 = vld [vmem:[%s360 + $0xe8] sm:$0xff]
      %v1609 = vld [vmem:[%s360 + $0xf0] sm:$0xff]
      %v1610 = vld [vmem:[%s360 + $0xf8] sm:$0xff]
      %v1611 = vmul.f32 %v1421, %v1579
      %v1612 = vmul.f32 %v1426, %v1580
      %v1613 = vmul.f32 %v1431, %v1581
      %v1614 = vmul.f32 %v1436, %v1582
      %v1615 = vmul.f32 %v1441, %v1583
      %v1616 = vmul.f32 %v1446, %v1584
      %v1617 = vmul.f32 %v1451, %v1585
      %v1618 = vmul.f32 %v1456, %v1586
      %v1619 = vmul.f32 %v1461, %v1587
      %v1620 = vmul.f32 %v1466, %v1588
      %v1621 = vmul.f32 %v1471, %v1589
      %v1622 = vmul.f32 %v1476, %v1590
      %v1623 = vmul.f32 %v1481, %v1591
      %v1624 = vmul.f32 %v1486, %v1592
      %v1625 = vmul.f32 %v1491, %v1593
      %v1626 = vmul.f32 %v1496, %v1594
      %v1627 = vmul.f32 %v1501, %v1595
      %v1628 = vmul.f32 %v1506, %v1596
      %v1629 = vmul.f32 %v1511, %v1597
      %v1630 = vmul.f32 %v1516, %v1598
      %v1631 = vmul.f32 %v1521, %v1599
      %v1632 = vmul.f32 %v1526, %v1600
      %v1633 = vmul.f32 %v1531, %v1601
      %v1634 = vmul.f32 %v1536, %v1602
      %v1635 = vmul.f32 %v1541, %v1603
      %v1636 = vmul.f32 %v1546, %v1604
      %v1637 = vmul.f32 %v1551, %v1605
      %v1638 = vmul.f32 %v1556, %v1606
      %v1639 = vmul.f32 %v1561, %v1607
      %v1640 = vmul.f32 %v1566, %v1608
      %v1641 = vmul.f32 %v1571, %v1609
      %v1642 = vmul.f32 %v1576, %v1610
      %v1643 = vpack.c.bf16 %v1612, %v1611
      %v1644 = vpack.c.bf16 %v1614, %v1613
      %v1645 = vpack.c.bf16 %v1616, %v1615
      %v1646 = vpack.c.bf16 %v1618, %v1617
      %v1647 = vpack.c.bf16 %v1620, %v1619
      %v1648 = vpack.c.bf16 %v1622, %v1621
      %v1649 = vpack.c.bf16 %v1624, %v1623
      %v1650 = vpack.c.bf16 %v1626, %v1625
      %v1651 = vpack.c.bf16 %v1628, %v1627
      %v1652 = vpack.c.bf16 %v1630, %v1629
      %v1653 = vpack.c.bf16 %v1632, %v1631
      %v1654 = vpack.c.bf16 %v1634, %v1633
      %v1655 = vpack.c.bf16 %v1636, %v1635
      %v1656 = vpack.c.bf16 %v1638, %v1637
      %v1657 = vpack.c.bf16 %v1640, %v1639
      %v1658 = vpack.c.bf16 %v1642, %v1641
      %1659 = vmatprep.subr.bf16.mxu0 0
      %1660 = vmatpush1.bf16.msra.mxu0 %v1643
      %1661 = vmatprep.subr.bf16.mxu0 0
      %1662 = vmatpush1.bf16.msra.mxu0 %v1644
      %1663 = vmatprep.subr.bf16.mxu0 0
      %1664 = vmatpush1.bf16.msra.mxu0 %v1645
      %1665 = vmatprep.subr.bf16.mxu0 0
      %1666 = vmatpush1.bf16.msra.mxu0 %v1646
      %1667 = vmatprep.subr.bf16.mxu0 0
      %1668 = vmatpush1.bf16.msra.mxu0 %v1647
      %1669 = vmatprep.subr.bf16.mxu0 0
      %1670 = vmatpush1.bf16.msra.mxu0 %v1648
      %1671 = vmatprep.subr.bf16.mxu0 0
      %1672 = vmatpush1.bf16.msra.mxu0 %v1649
      %1673 = vmatprep.subr.bf16.mxu0 0
      %1674 = vmatpush1.bf16.msra.mxu0 %v1650
      %1675 = vmatprep.subr.bf16.mxu0 0
      %1676 = vmatpush1.bf16.msra.mxu0 %v1651
      %1677 = vmatprep.subr.bf16.mxu0 0
      %1678 = vmatpush1.bf16.msra.mxu0 %v1652
      %1679 = vmatprep.subr.bf16.mxu0 0
      %1680 = vmatpush1.bf16.msra.mxu0 %v1653
      %1681 = vmatprep.subr.bf16.mxu0 0
      %1682 = vmatpush1.bf16.msra.mxu0 %v1654
      %1683 = vmatprep.subr.bf16.mxu0 0
      %1684 = vmatpush1.bf16.msra.mxu0 %v1655
      %1685 = vmatprep.subr.bf16.mxu0 0
      %1686 = vmatpush1.bf16.msra.mxu0 %v1656
      %1687 = vmatprep.subr.bf16.mxu0 0
      %1688 = vmatpush1.bf16.msra.mxu0 %v1657
      %1689 = vmatprep.subr.bf16.mxu0 0
      %1690 = vmatpush1.bf16.msra.mxu0 %v1658
      %1691 = vmatprep.mubr.bf16.mxu0 %v1183
      %1692 = vmatmul.mubr.bf16.gmra.mrb[0].mxu0 %v1182
      %v1693 = vpop.f32.mrb[0].mxu0
      %v1694 = vadd.f32 0.0, %v1693
      %v1695 = vpop.f32.mrb[0].mxu0
      %v1696 = vpop.f32.mrb[0].mxu0
      %v1697 = vadd.f32 0.0, %v1696
      %v1698 = vpop.f32.mrb[0].mxu0
      %1699 = vmatprep.mubr.bf16.mxu0 %v1185
      %1700 = vmatmul.mubr.bf16.gmra.mrb[0].mxu0 %v1184
      %v1701 = vpop.f32.mrb[0].mxu0
      %v1702 = vadd.f32 0.0, %v1701
      %v1703 = vpop.f32.mrb[0].mxu0
      %v1704 = vpop.f32.mrb[0].mxu0
      %v1705 = vadd.f32 0.0, %v1704
      %v1706 = vpop.f32.mrb[0].mxu0
      %1707 = vdwg.mxu0
      %v1708 = vsel %vm946, %v1020, 0
      %1710 = vmatprep.subr.mxu0 0.0
      %1711 = vmatpush1.msra.mxu0 %v1257
      %1712 = vmatprep.subr.mxu0 0.0
      %1713 = vmatpush1.msra.mxu0 0.0
      %1714 = vmatprep.subr.mxu0 0.0
      %1715 = vmatpush1.msra.mxu0 0.0
      %1716 = vmatprep.subr.mxu0 0.0
      %1717 = vmatpush1.msra.mxu0 0.0
      %1718 = vmatprep.subr.mxu0 0.0
      %1719 = vmatpush1.msra.mxu0 0.0
      %1720 = vmatprep.subr.mxu0 0.0
      %1721 = vmatpush1.msra.mxu0 0.0
      %1722 = vmatprep.subr.mxu0 0.0
      %1723 = vmatpush1.msra.mxu0 0.0
      %1724 = vmatprep.subr.mxu0 0.0
      %1725 = vmatpush1.msra.mxu0 0.0
      %1726 = vmatprep.subr.mxu0 0.0
      %1727 = vmatpush1.msra.mxu0 0.0
      %1728 = vmatprep.subr.mxu0 0.0
      %1729 = vmatpush1.msra.mxu0 0.0
      %1730 = vmatprep.subr.mxu0 0.0
      %1731 = vmatpush1.msra.mxu0 0.0
      %1732 = vmatprep.subr.mxu0 0.0
      %1733 = vmatpush1.msra.mxu0 0.0
      %1734 = vmatprep.subr.mxu0 0.0
      %1735 = vmatpush1.msra.mxu0 0.0
      %1736 = vmatprep.subr.mxu0 0.0
      %1737 = vmatpush1.msra.mxu0 0.0
      %1738 = vmatprep.subr.mxu0 0.0
      %1739 = vmatpush1.msra.mxu0 0.0
      %1740 = vmatprep.subr.mxu0 0.0
      %1741 = vmatpush1.msra.mxu0 0.0
      %1742 = vmatprep.subr.mxu0 0.0
      %1743 = vmatpush1.msra.mxu0 0.0
      %1744 = vmatprep.subr.mxu0 0.0
      %1745 = vmatpush1.msra.mxu0 0.0
      %1746 = vmatprep.subr.mxu0 0.0
      %1747 = vmatpush1.msra.mxu0 0.0
      %1748 = vmatprep.subr.mxu0 0.0
      %1749 = vmatpush1.msra.mxu0 0.0
      %1750 = vmatprep.subr.mxu0 0.0
      %1751 = vmatpush1.msra.mxu0 0.0
      %1752 = vmatprep.subr.mxu0 0.0
      %1753 = vmatpush1.msra.mxu0 0.0
      %1754 = vmatprep.subr.mxu0 0.0
      %1755 = vmatpush1.msra.mxu0 0.0
      %1756 = vmatprep.subr.mxu0 0.0
      %1757 = vmatpush1.msra.mxu0 0.0
      %1758 = vmatprep.subr.mxu0 0.0
      %1759 = vmatpush1.msra.mxu0 0.0
      %1760 = vmatprep.subr.mxu0 0.0
      %1761 = vmatpush1.msra.mxu0 0.0
      %1762 = vmatprep.subr.mxu0 0.0
      %1763 = vmatpush1.msra.mxu0 0.0
      %1764 = vmatprep.subr.mxu0 0.0
      %1765 = vmatpush1.msra.mxu0 0.0
      %1766 = vmatprep.subr.mxu0 0.0
      %1767 = vmatpush1.msra.mxu0 0.0
      %1768 = vmatprep.subr.mxu0 0.0
      %1769 = vmatpush1.msra.mxu0 0.0
      %1770 = vmatprep.subr.mxu0 0.0
      %1771 = vmatpush1.msra.mxu0 0.0
      %1772 = vmatprep.subr.mxu0 0.0
      %1773 = vmatpush1.msra.mxu0 0.0
      %1774 = vmatprep.mubr.f32.mxu0 0.0
      %1775 = vmatmul.mubr.f32.gmra.mrb[0].mxu0 %v1708
      %v1776 = vpop.f32.mrb[0].mxu0
      %v1777 = vadd.f32 0.0, %v1776
      %v1778 = vpop.f32.mrb[0].mxu0
      %1779 = vdwg.mxu0
      %v1780 = vld [vmem:[%s377] sm:$0xff]
      %v1781 = vld [vmem:[%s377 + $0x8] sm:$0xff]
      %v1782 = vld [vmem:[%s377 + $0x10] sm:$0xff]
      %v1783 = vld [vmem:[%s377 + $0x18] sm:$0xff]
      %v1784 = vlaneseq
      %v1785 = vshrl.u32 %v1784, 7
      %v1786 = vsub.s32 0, %v1785
      %v1787 = vrot.slane %v1777, %v1786
      %v1788 = vmul.f32 %v1780, %v1787
      %v1789 = vmul.f32 %v1781, %v1787
      %v1790 = vmul.f32 %v1782, %v1787
      %v1791 = vmul.f32 %v1783, %v1787
      %v1792 = vadd.f32 %v1788, %v1694
      %v1793 = vadd.f32 %v1789, %v1697
      %v1794 = vadd.f32 %v1790, %v1702
      %v1795 = vadd.f32 %v1791, %v1705
      %1796 = vst.msk [vmem:[%s377] sm:$0xff] %vm624, %v1792
      %1797 = vst.msk [vmem:[%s377 + $0x8] sm:$0xff] %vm624, %v1793
      %1798 = vst.msk [vmem:[%s377 + $0x10] sm:$0xff] %vm624, %v1794
      %1799 = vst.msk [vmem:[%s377 + $0x18] sm:$0xff] %vm624, %v1795
      %p1800 = scmp.eq.s32.totalorder %s23, 2
      // Predicated region
      $region53: #{ingram_relation_forward.3} parent=47 // pred_check
        %p1801 = pneg %p1800
      $region54: #{ingram_relation_forward.3} parent=47 // pred_check_branch
        %1803 = sbr.rel (%p1801) target = $region56
      $region55: #{ingram_relation_forward.3} parent=47 // pred_region
        %v1804 = vld [vmem:[#allocation3] sm:$0xff]
        %v1805 = vld [vmem:[#allocation3 + $0x8] sm:$0xff]
        %v1806 = vld [vmem:[#allocation3 + $0x10] sm:$0xff]
        %v1807 = vld [vmem:[#allocation3 + $0x18] sm:$0xff]
        %v1808 = vld [vmem:[%s6] sm:$0xff]
        %v1810 = vsel %vm946, %v1804, 0
        %v1813 = vsel %vm946, %v1805, 0
        %v1816 = vsel %vm946, %v1806, 0
        %v1819 = vsel %vm946, %v1807, 0
        %1821 = vmatprep.subr.mxu0 0.0
        %1822 = vmatpush1.msra.mxu0 %v1808
        %1823 = vmatprep.subr.mxu0 0.0
        %1824 = vmatpush1.msra.mxu0 0.0
        %1825 = vmatprep.subr.mxu0 0.0
        %1826 = vmatpush1.msra.mxu0 0.0
        %1827 = vmatprep.subr.mxu0 0.0
        %1828 = vmatpush1.msra.mxu0 0.0
        %1829 = vmatprep.subr.mxu0 0.0
        %1830 = vmatpush1.msra.mxu0 0.0
        %1831 = vmatprep.subr.mxu0 0.0
        %1832 = vmatpush1.msra.mxu0 0.0
        %1833 = vmatprep.subr.mxu0 0.0
        %1834 = vmatpush1.msra.mxu0 0.0
        %1835 = vmatprep.subr.mxu0 0.0
        %1836 = vmatpush1.msra.mxu0 0.0
        %1837 = vmatprep.subr.mxu0 0.0
        %1838 = vmatpush1.msra.mxu0 0.0
        %1839 = vmatprep.subr.mxu0 0.0
        %1840 = vmatpush1.msra.mxu0 0.0
        %1841 = vmatprep.subr.mxu0 0.0
        %1842 = vmatpush1.msra.mxu0 0.0
        %1843 = vmatprep.subr.mxu0 0.0
        %1844 = vmatpush1.msra.mxu0 0.0
        %1845 = vmatprep.subr.mxu0 0.0
        %1846 = vmatpush1.msra.mxu0 0.0
        %1847 = vmatprep.subr.mxu0 0.0
        %1848 = vmatpush1.msra.mxu0 0.0
        %1849 = vmatprep.subr.mxu0 0.0
        %1850 = vmatpush1.msra.mxu0 0.0
        %1851 = vmatprep.subr.mxu0 0.0
        %1852 = vmatpush1.msra.mxu0 0.0
        %1853 = vmatprep.subr.mxu0 0.0
        %1854 = vmatpush1.msra.mxu0 0.0
        %1855 = vmatprep.subr.mxu0 0.0
        %1856 = vmatpush1.msra.mxu0 0.0
        %1857 = vmatprep.subr.mxu0 0.0
        %1858 = vmatpush1.msra.mxu0 0.0
        %1859 = vmatprep.subr.mxu0 0.0
        %1860 = vmatpush1.msra.mxu0 0.0
        %1861 = vmatprep.subr.mxu0 0.0
        %1862 = vmatpush1.msra.mxu0 0.0
        %1863 = vmatprep.subr.mxu0 0.0
        %1864 = vmatpush1.msra.mxu0 0.0
        %1865 = vmatprep.subr.mxu0 0.0
        %1866 = vmatpush1.msra.mxu0 0.0
        %1867 = vmatprep.subr.mxu0 0.0
        %1868 = vmatpush1.msra.mxu0 0.0
        %1869 = vmatprep.subr.mxu0 0.0
        %1870 = vmatpush1.msra.mxu0 0.0
        %1871 = vmatprep.subr.mxu0 0.0
        %1872 = vmatpush1.msra.mxu0 0.0
        %1873 = vmatprep.subr.mxu0 0.0
        %1874 = vmatpush1.msra.mxu0 0.0
        %1875 = vmatprep.subr.mxu0 0.0
        %1876 = vmatpush1.msra.mxu0 0.0
        %1877 = vmatprep.subr.mxu0 0.0
        %1878 = vmatpush1.msra.mxu0 0.0
        %1879 = vmatprep.subr.mxu0 0.0
        %1880 = vmatpush1.msra.mxu0 0.0
        %1881 = vmatprep.subr.mxu0 0.0
        %1882 = vmatpush1.msra.mxu0 0.0
        %1883 = vmatprep.subr.mxu0 0.0
        %1884 = vmatpush1.msra.mxu0 0.0
        %1885 = vmatprep.mubr.f32.mxu0 0.0
        %1886 = vmatmul.mubr.f32.gmra.mrb[0].mxu0 %v1810
        %v1887 = vpop.f32.mrb[0].mxu0
        %v1888 = vadd.f32 1e-16, %v1887
        %v1889 = vpop.f32.mrb[0].mxu0
        %1890 = vmatprep.mubr.f32.mxu0 0.0
        %1891 = vmatmul.mubr.f32.gmra.mrb[0].mxu0 %v1813
        %v1892 = vpop.f32.mrb[0].mxu0
        %v1893 = vadd.f32 1e-16, %v1892
        %v1894 = vpop.f32.mrb[0].mxu0
        %1895 = vmatprep.mubr.f32.mxu0 0.0
        %1896 = vmatmul.mubr.f32.gmra.mrb[0].mxu0 %v1816
        %v1897 = vpop.f32.mrb[0].mxu0
        %v1898 = vadd.f32 1e-16, %v1897
        %v1899 = vpop.f32.mrb[0].mxu0
        %1900 = vmatprep.mubr.f32.mxu0 0.0
        %1901 = vmatmul.mubr.f32.gmra.mrb[0].mxu0 %v1819
        %v1902 = vpop.f32.mrb[0].mxu0
        %v1903 = vadd.f32 1e-16, %v1902
        %v1904 = vpop.f32.mrb[0].mxu0
        %1905 = vdwg.mxu0
        %v1906 = vrcp.pop %v1888
        %v1907 = vrcp.pop %v1893
        %v1908 = vrcp.pop %v1898
        %v1909 = vrcp.pop %v1903
        %v1910 = vmul.f32 %v1888, %v1906
        %v1911 = vmul.f32 %v1893, %v1907
        %v1912 = vmul.f32 %v1898, %v1908
        %v1913 = vmul.f32 %v1903, %v1909
        %v1914 = vsub.f32 2.0, %v1910
        %v1915 = vsub.f32 2.0, %v1911
        %v1916 = vsub.f32 2.0, %v1912
        %v1917 = vsub.f32 2.0, %v1913
        %v1918 = vmul.f32 %v1906, %v1914
        %v1919 = vmul.f32 %v1907, %v1915
        %v1920 = vmul.f32 %v1908, %v1916
        %v1921 = vmul.f32 %v1909, %v1917
        %v1922 = vld [vmem:[%s377] sm:$0xff]
        %v1923 = vld [vmem:[%s377 + $0x8] sm:$0xff]
        %v1924 = vld [vmem:[%s377 + $0x10] sm:$0xff]
        %v1925 = vld [vmem:[%s377 + $0x18] sm:$0xff]
        %v1926 = vmul.f32 %v1922, %v1918
        %v1927 = vmul.f32 %v1923, %v1919
        %v1928 = vmul.f32 %v1924, %v1920
        %v1929 = vmul.f32 %v1925, %v1921
        %1930 = vst.msk [vmem:[%s377] sm:$0xff] %vm624, %v1926
        %1931 = vst.msk [vmem:[%s377 + $0x8] sm:$0xff] %vm624, %v1927
        %1932 = vst.msk [vmem:[%s377 + $0x10] sm:$0xff] %vm624, %v1928
        %1933 = vst.msk [vmem:[%s377 + $0x18] sm:$0xff] %vm624, %v1929
      $region56: #{ingram_relation_forward.3} parent=47 // pred_fallthru
        _
      %s1934 = smul.u32 4, %s22
      %p1935 = scmp.lt.s32.totalorder %s1934, 7
      %s1936 = scalar_select %p1935, %s1934, 7
      %s1937 = smul.addr %s1936, 8
      %s1938 = scalar_lea.vmem %s7, %s1937
      // Predicated region
      $region57: #{ingram_relation_forward.3} parent=47 // pred_check
        %p1939 = pneg %p220
      $region58: #{ingram_relation_forward.3} parent=47 // pred_check_branch
        %1941 = sbr.rel (%p1939) target = $region60
      $region59: #{ingram_relation_forward.3} parent=47 // pred_region
        %s1942 = smul.u32 4, %s22
      $region60: #{ingram_relation_forward.3} parent=47 // pred_fallthru
        _
    $region48: #{ingram_relation_forward.3} parent=5 // pred_fallthru
      _
    %p1943 = scmp.le.s32.totalorder 2, %s13
    // Predicated region
    $region61: #{ingram_relation_forward.3} parent=5 // pred_check
      %p1944 = pneg %p1943
    $region62: #{ingram_relation_forward.3} parent=5 // pred_check_branch
      %1946 = sbr.rel (%p1944) target = $region64
    $region63: #{ingram_relation_forward.3} parent=5 // pred_region
      %s1947 = ssub.s32 %s13, 2
      // Predicated region
      $region65: #{ingram_relation_forward.3} parent=63 // pred_check
        %p1948 = pneg %p226
      $region66: #{ingram_relation_forward.3} parent=63 // pred_check_branch
        %1950 = sbr.rel (%p1948) target = $region68
      $region67: #{ingram_relation_forward.3} parent=63 // pred_region
        %s1951 = smul.u32 4, %s24
        %p1952 = scmp.lt.s32.totalorder %s1951, 7
        %s1953 = scalar_select %p1952, %s1951, 7
        %s1954 = smul.addr %s1953, 8
        %s1955 = scalar_lea.vmem %s7, %s1954
      $region68: #{ingram_relation_forward.3} parent=63 // pred_fallthru
        _
    $region64: #{ingram_relation_forward.3} parent=5 // pred_fallthru
      _
  $region6: #{ingram_relation_forward.3} parent=0 // loop_footer
    %s17 = sadd.s32 1, %s13
  $region7: #{ingram_relation_forward.3} parent=0 // loop_footer_branch
    %12 = sbr.rel target = $region3
  $region8: #{ingram_relation_forward.3} parent=0 // loop_exit
    _

</llo_original>
